<compile_context>
chip_gen: v6e
topology: v6e:2x2x1
jax: 0.10.0
libtpu: 0.0.40
codegen_flags: <defaults>
</compile_context>

<pallas_src>
import jax
import jax.numpy as jnp
from jax.experimental import pallas as pl
from jax.experimental.pallas import tpu as pltpu

# ----------------------------- config ---------------------------------------
B = 2            # batch
S = 8            # sequence length
H = 32           # hidden size
NH = 4           # attention heads
DH = H // NH     # head dim
FF = 64          # intermediate (FFN) size
LAYERS = 2       # encoder layers
VOCAB = 100
MAX_POS = 64
TYPE_VOCAB = 2
LN_EPS = 1e-12   # BERT LayerNorm eps
MASK_NEG = -10000.0
ATTN_SCALE = 1.0 / (DH ** 0.5)


# ----------------------------- helpers ---------------------------------------
def _const_spec(shape):
    """Whole-array block, same block for every grid step (weights)."""
    nd = len(shape)
    return pl.BlockSpec(shape, lambda b, _nd=nd: (0,) * _nd)


def _ln(z, gamma, beta):
    """LayerNorm over the last axis (on f32 values inside the kernel)."""
    mu = jnp.mean(z, axis=-1, keepdims=True)
    zc = z - mu
    var = jnp.mean(zc * zc, axis=-1, keepdims=True)
    return zc * jax.lax.rsqrt(var + LN_EPS) * gamma + beta


def _gelu_tanh(x):
    # TODO(synk): HF BERT uses exact erf-GELU; tanh approximation used because
    # erf is not guaranteed to lower in Mosaic.
    return 0.5 * x * (1.0 + jnp.tanh(0.7978845608028654 *
                                     (x + 0.044715 * x * x * x)))


# ----------------------------- fused kernel ----------------------------------
def _bert_fused_kernel(emb_ref, bias_ref, eg_ref, eb_ref,
                       wqkv_ref, bqkv_ref, wo_ref, bo_ref,
                       ln1g_ref, ln1b_ref, w1_ref, b1_ref,
                       w2_ref, b2_ref, ln2g_ref, ln2b_ref, o_ref):
    """Embedding LayerNorm + all encoder layers for one batch element.

    Grid is (B,), marked "parallel" (shards across TensorCores on multi-TC
    chips).  Every intermediate lives in vregs/VMEM as values; the only output
    store is one lane-dense (S, H) write per grid step.
    """
    h = _ln(emb_ref[0], eg_ref[...], eb_ref[...])            # (S, H) f32
    bias = bias_ref[...]                                     # (1, 1, S) additive mask

    for li in range(LAYERS):                                 # statically unrolled
        # ---- self-attention -------------------------------------------------
        # Fused QKV projection: bf16 operands on the MXU, f32 accumulation.
        # (1/sqrt(DH) already folded into the Q columns of wqkv.)
        qkv = jnp.dot(h.astype(jnp.bfloat16), wqkv_ref[li],
                      preferred_element_type=jnp.float32) + bqkv_ref[li]   # (S, 3H)
        q, k, v = qkv[:, :H], qkv[:, H:2 * H], qkv[:, 2 * H:]

        # Head-major (NH, S, DH) built from aligned lane slices (no lane-dim
        # reshape), so attention runs as two *batched* MXU matmuls instead of
        # B*NH tiny per-head dots.
        qh = jnp.stack([q[:, i * DH:(i + 1) * DH] for i in range(NH)], axis=0)
        kh = jnp.stack([k[:, i * DH:(i + 1) * DH] for i in range(NH)], axis=0)
        vh = jnp.stack([v[:, i * DH:(i + 1) * DH] for i in range(NH)], axis=0)

        # Scores: contract the last dims directly (trans_b form -> no kh.T).
        s = jnp.einsum('hqd,hkd->hqk',
                       qh.astype(jnp.bfloat16), kh.astype(jnp.bfloat16),
                       preferred_element_type=jnp.float32)                 # (NH, S, S)
        s = s + bias                                                       # bcast over heads/queries
        s = s - jnp.max(s, axis=-1, keepdims=True)
        p = jnp.exp(s)
        p = p * pl.reciprocal(jnp.sum(p, axis=-1, keepdims=True), approx=True)

        ctx_h = jnp.einsum('hqk,hkd->hqd',
                           p.astype(jnp.bfloat16), vh.astype(jnp.bfloat16),
                           preferred_element_type=jnp.float32)             # (NH, S, DH)
        # Merge heads back into a lane-dense (S, H) value (no VMEM scratch,
        # no masked partial stores).
        ctx = jnp.concatenate([ctx_h[i] for i in range(NH)], axis=-1)      # (S, H)

        attn = jnp.dot(ctx.astype(jnp.bfloat16), wo_ref[li],
                       preferred_element_type=jnp.float32) + bo_ref[li]
        h1 = _ln(attn + h, ln1g_ref[li], ln1b_ref[li])

        # ---- FFN -------------------------------------------------------------
        ff = jnp.dot(h1.astype(jnp.bfloat16), w1_ref[li],
                     preferred_element_type=jnp.float32) + b1_ref[li]
        ff = _gelu_tanh(ff)
        ff = jnp.dot(ff.astype(jnp.bfloat16), w2_ref[li],
                     preferred_element_type=jnp.float32) + b2_ref[li]
        h = _ln(ff + h1, ln2g_ref[li], ln2b_ref[li])

    o_ref[0] = h.astype(o_ref.dtype)       # single lane-dense store per grid step


# ----------------------------- model glue ------------------------------------
def init_params(key):
    std = 0.02
    ks = jax.random.split(key, 7)
    p = {}
    p["word_emb"] = std * jax.random.normal(ks[0], (VOCAB, H), jnp.float32)
    p["pos_emb"] = std * jax.random.normal(ks[1], (MAX_POS, H), jnp.float32)
    p["type_emb"] = std * jax.random.normal(ks[2], (TYPE_VOCAB, H), jnp.float32)
    p["emb_ln_g"] = jnp.ones((1, H), jnp.float32)
    p["emb_ln_b"] = jnp.zeros((1, H), jnp.float32)

    # Fold the 1/sqrt(DH) attention scale into the Q projection (weight + bias).
    qkv_scale = jnp.concatenate(
        [jnp.full((H,), ATTN_SCALE, jnp.float32), jnp.ones((2 * H,), jnp.float32)])

    wqkv = std * jax.random.normal(ks[3], (LAYERS, H, 3 * H), jnp.float32) * qkv_scale
    bqkv = jnp.zeros((LAYERS, 1, 3 * H), jnp.float32) * qkv_scale   # zeros; scale kept for intent

    # Dense matmul weights in bf16 (bf16-native MXU on v6e/v7x, half DMA bytes);
    # biases / LayerNorm params stay f32 (added/used on f32 values).
    p["wqkv"] = wqkv.astype(jnp.bfloat16)
    p["bqkv"] = bqkv
    p["wo"] = (std * jax.random.normal(ks[4], (LAYERS, H, H), jnp.float32)).astype(jnp.bfloat16)
    p["bo"] = jnp.zeros((LAYERS, 1, H), jnp.float32)
    p["ln1_g"] = jnp.ones((LAYERS, 1, H), jnp.float32)
    p["ln1_b"] = jnp.zeros((LAYERS, 1, H), jnp.float32)
    p["w1"] = (std * jax.random.normal(ks[5], (LAYERS, H, FF), jnp.float32)).astype(jnp.bfloat16)
    p["b1"] = jnp.zeros((LAYERS, 1, FF), jnp.float32)
    p["w2"] = (std * jax.random.normal(ks[6], (LAYERS, FF, H), jnp.float32)).astype(jnp.bfloat16)
    p["b2"] = jnp.zeros((LAYERS, 1, H), jnp.float32)
    p["ln2_g"] = jnp.ones((LAYERS, 1, H), jnp.float32)
    p["ln2_b"] = jnp.zeros((LAYERS, 1, H), jnp.float32)
    return p


def bert_forward(params, x_ids, segs, mask):
    """Equivalent of Bert.forward: BertModel(x, attention_mask=mask,
    position_ids=segs)[0]  ->  (B, S, H) last hidden state."""
    # Embedding table gathers stay in XLA (no clean Pallas gather at these shapes).
    word = jnp.take(params["word_emb"], x_ids, axis=0)
    pos = jnp.take(params["pos_emb"], segs, axis=0)          # segs used as position_ids (matches PyTorch call)
    tok = jnp.take(params["type_emb"], jnp.zeros_like(x_ids), axis=0)  # token_type_ids default to 0
    emb = (word + pos + tok).astype(jnp.float32)                       # (B, S, H)

    # HF extended attention mask: (1 - mask) * -10000; broadcast in-kernel.
    mask_bias = ((1.0 - mask.astype(jnp.float32)) * MASK_NEG).reshape(B, 1, S)

    args = (emb, mask_bias,
            params["emb_ln_g"], params["emb_ln_b"],
            params["wqkv"], params["bqkv"], params["wo"], params["bo"],
            params["ln1_g"], params["ln1_b"], params["w1"], params["b1"],
            params["w2"], params["b2"], params["ln2_g"], params["ln2_b"])

    in_specs = ([pl.BlockSpec((1, S, H), lambda b: (b, 0, 0)),     # per-batch hidden rows
                 pl.BlockSpec((1, 1, S), lambda b: (b, 0, 0))]     # per-batch mask bias
                + [_const_spec(a.shape) for a in args[2:]])        # weights: full-array blocks

    out = pl.pallas_call(
        _bert_fused_kernel,
        out_shape=jax.ShapeDtypeStruct((B, S, H), jnp.float32),
        grid=(B,),
        in_specs=in_specs,
        out_specs=pl.BlockSpec((1, S, H), lambda b: (b, 0, 0)),
        compiler_params=pltpu.CompilerParams(
            dimension_semantics=("parallel",)),
    )(*args)
    return out


# ----------------------------- main ------------------------------------------
if __name__ == "__main__":
    key = jax.random.PRNGKey(0)
    pkey, xkey = jax.random.split(key)
    params = init_params(pkey)

    # Deterministic small example inputs.
    x_ids = jax.random.randint(xkey, (B, S), 0, VOCAB, dtype=jnp.int32)
    # `segs` (segment ids 0/1) are passed as position_ids, matching the PyTorch code.
    segs = jnp.concatenate(
        [jnp.zeros((B, S // 2), jnp.int32), jnp.ones((B, S - S // 2), jnp.int32)],
        axis=1)
    # attention mask: batch 0 fully valid, batch 1 has 2 padded positions.
    mask = jnp.array([[1] * S, [1] * (S - 2) + [0] * 2], dtype=jnp.float32)

    top_vec = jax.jit(bert_forward)(params, x_ids, segs, mask)
    jax.block_until_ready(top_vec)
    assert top_vec.shape == (B, S, H) and top_vec.dtype == jnp.float32
    print("KERNEL_OK")
</pallas_src>

<mosaic_0001>
module attributes {stable_mosaic.version = 11 : i64} {
  func.func @_bert_fused_kernel(%arg0: i32, %arg1: memref<1x8x32xf32, #tpu.memory_space<vmem>>, %arg2: memref<1x1x8xf32, #tpu.memory_space<vmem>>, %arg3: memref<1x32xf32, #tpu.memory_space<vmem>>, %arg4: memref<1x32xf32, #tpu.memory_space<vmem>>, %arg5: memref<2x32x96xbf16, #tpu.memory_space<vmem>>, %arg6: memref<2x1x96xf32, #tpu.memory_space<vmem>>, %arg7: memref<2x32x32xbf16, #tpu.memory_space<vmem>>, %arg8: memref<2x1x32xf32, #tpu.memory_space<vmem>>, %arg9: memref<2x1x32xf32, #tpu.memory_space<vmem>>, %arg10: memref<2x1x32xf32, #tpu.memory_space<vmem>>, %arg11: memref<2x32x64xbf16, #tpu.memory_space<vmem>>, %arg12: memref<2x1x64xf32, #tpu.memory_space<vmem>>, %arg13: memref<2x64x32xbf16, #tpu.memory_space<vmem>>, %arg14: memref<2x1x32xf32, #tpu.memory_space<vmem>>, %arg15: memref<2x1x32xf32, #tpu.memory_space<vmem>>, %arg16: memref<2x1x32xf32, #tpu.memory_space<vmem>>, %arg17: memref<1x8x32xf32, #tpu.memory_space<vmem>>) attributes {dimension_semantics = [#tpu.dimension_semantics<parallel>], iteration_bounds = array<i64: 2>, scalar_prefetch = 0 : i64, scratch_operands = 0 : i64, tpu.core_type = #tpu.core_type<tc>, window_params = [{transform_indices = @transform_0, window_bounds = array<i64: 1, 8, 32>}, {transform_indices = @transform_1, window_bounds = array<i64: 1, 1, 8>}, {pipeline_mode = #tpu.pipeline_mode<synchronous>, transform_indices = @transform_2, window_bounds = array<i64: 1, 32>}, {pipeline_mode = #tpu.pipeline_mode<synchronous>, transform_indices = @transform_3, window_bounds = array<i64: 1, 32>}, {pipeline_mode = #tpu.pipeline_mode<synchronous>, transform_indices = @transform_4, window_bounds = array<i64: 2, 32, 96>}, {pipeline_mode = #tpu.pipeline_mode<synchronous>, transform_indices = @transform_5, window_bounds = array<i64: 2, 1, 96>}, {pipeline_mode = #tpu.pipeline_mode<synchronous>, transform_indices = @transform_6, window_bounds = array<i64: 2, 32, 32>}, {pipeline_mode = #tpu.pipeline_mode<synchronous>, transform_indices = @transform_7, window_bounds = array<i64: 2, 1, 32>}, {pipeline_mode = #tpu.pipeline_mode<synchronous>, transform_indices = @transform_8, window_bounds = array<i64: 2, 1, 32>}, {pipeline_mode = #tpu.pipeline_mode<synchronous>, transform_indices = @transform_9, window_bounds = array<i64: 2, 1, 32>}, {pipeline_mode = #tpu.pipeline_mode<synchronous>, transform_indices = @transform_10, window_bounds = array<i64: 2, 32, 64>}, {pipeline_mode = #tpu.pipeline_mode<synchronous>, transform_indices = @transform_11, window_bounds = array<i64: 2, 1, 64>}, {pipeline_mode = #tpu.pipeline_mode<synchronous>, transform_indices = @transform_12, window_bounds = array<i64: 2, 64, 32>}, {pipeline_mode = #tpu.pipeline_mode<synchronous>, transform_indices = @transform_13, window_bounds = array<i64: 2, 1, 32>}, {pipeline_mode = #tpu.pipeline_mode<synchronous>, transform_indices = @transform_14, window_bounds = array<i64: 2, 1, 32>}, {pipeline_mode = #tpu.pipeline_mode<synchronous>, transform_indices = @transform_15, window_bounds = array<i64: 2, 1, 32>}, {transform_indices = @transform_16, window_bounds = array<i64: 1, 8, 32>}]} {
    %c0 = arith.constant 0 : index
    %c0_0 = arith.constant 0 : index
    %c0_1 = arith.constant 0 : index
    %0 = vector.load %arg1[%c0, %c0_0, %c0_1] : memref<1x8x32xf32, #tpu.memory_space<vmem>>, vector<1x8x32xf32>
    %1 = vector.shape_cast %0 : vector<1x8x32xf32> to vector<8x32xf32>
    %c0_2 = arith.constant 0 : index
    %c0_3 = arith.constant 0 : index
    %2 = vector.load %arg3[%c0_2, %c0_3] : memref<1x32xf32, #tpu.memory_space<vmem>>, vector<1x32xf32>
    %c0_4 = arith.constant 0 : index
    %c0_5 = arith.constant 0 : index
    %3 = vector.load %arg4[%c0_4, %c0_5] : memref<1x32xf32, #tpu.memory_space<vmem>>, vector<1x32xf32>
    %cst = arith.constant dense<0.000000e+00> : vector<8xf32>
    %4 = vector.multi_reduction <add>, %1, %cst [1] : vector<8x32xf32> to vector<8xf32>
    %5 = vector.shape_cast %4 : vector<8xf32> to vector<8x1xf32>
    %cst_6 = arith.constant 3.200000e+01 : f32
    %6 = vector.broadcast %cst_6 : f32 to vector<8x1xf32>
    %7 = arith.divf %5, %6 : vector<8x1xf32>
    %8 = vector.broadcast %7 : vector<8x1xf32> to vector<8x32xf32>
    %9 = arith.subf %1, %8 : vector<8x32xf32>
    %10 = arith.mulf %9, %9 : vector<8x32xf32>
    %cst_7 = arith.constant dense<0.000000e+00> : vector<8xf32>
    %11 = vector.multi_reduction <add>, %10, %cst_7 [1] : vector<8x32xf32> to vector<8xf32>
    %12 = vector.shape_cast %11 : vector<8xf32> to vector<8x1xf32>
    %cst_8 = arith.constant 3.200000e+01 : f32
    %13 = vector.broadcast %cst_8 : f32 to vector<8x1xf32>
    %14 = arith.divf %12, %13 : vector<8x1xf32>
    %cst_9 = arith.constant 9.99999996E-13 : f32
    %15 = vector.broadcast %cst_9 : f32 to vector<8x1xf32>
    %16 = arith.addf %14, %15 : vector<8x1xf32>
    %17 = math.rsqrt %16 : vector<8x1xf32>
    %18 = vector.broadcast %17 : vector<8x1xf32> to vector<8x32xf32>
    %19 = arith.mulf %9, %18 : vector<8x32xf32>
    %20 = vector.broadcast %2 : vector<1x32xf32> to vector<8x32xf32>
    %21 = arith.mulf %19, %20 : vector<8x32xf32>
    %22 = vector.broadcast %3 : vector<1x32xf32> to vector<8x32xf32>
    %23 = arith.addf %21, %22 : vector<8x32xf32>
    %c0_10 = arith.constant 0 : index
    %c0_11 = arith.constant 0 : index
    %c0_12 = arith.constant 0 : index
    %24 = vector.load %arg2[%c0_10, %c0_11, %c0_12] : memref<1x1x8xf32, #tpu.memory_space<vmem>>, vector<1x1x8xf32>
    %25 = arith.truncf %23 : vector<8x32xf32> to vector<8x32xbf16>
    %c0_13 = arith.constant 0 : index
    %c0_14 = arith.constant 0 : index
    %c0_15 = arith.constant 0 : index
    %26 = vector.load %arg5[%c0_13, %c0_14, %c0_15] : memref<2x32x96xbf16, #tpu.memory_space<vmem>>, vector<1x32x96xbf16>
    %27 = vector.shape_cast %26 : vector<1x32x96xbf16> to vector<32x96xbf16>
    %cst_16 = arith.constant dense<0.000000e+00> : vector<8x96xf32>
    %28 = tpu.matmul %25, %27, %cst_16 {dimension_numbers = #tpu.dot_dimension_numbers<[1], [0], [0], [1], [0, 0, 1, 1], [], []>} : vector<8x32xbf16>, vector<32x96xbf16>, vector<8x96xf32> -> vector<8x96xf32>
    %c0_17 = arith.constant 0 : index
    %c0_18 = arith.constant 0 : index
    %c0_19 = arith.constant 0 : index
    %29 = vector.load %arg6[%c0_17, %c0_18, %c0_19] : memref<2x1x96xf32, #tpu.memory_space<vmem>>, vector<1x1x96xf32>
    %30 = vector.shape_cast %29 : vector<1x1x96xf32> to vector<1x96xf32>
    %31 = vector.broadcast %30 : vector<1x96xf32> to vector<8x96xf32>
    %32 = arith.addf %28, %31 : vector<8x96xf32>
    %33 = vector.extract_strided_slice %32 {offsets = [0, 0], sizes = [8, 32], strides = [1, 1]} : vector<8x96xf32> to vector<8x32xf32>
    %34 = vector.extract_strided_slice %32 {offsets = [0, 32], sizes = [8, 32], strides = [1, 1]} : vector<8x96xf32> to vector<8x32xf32>
    %35 = vector.extract_strided_slice %32 {offsets = [0, 64], sizes = [8, 32], strides = [1, 1]} : vector<8x96xf32> to vector<8x32xf32>
    %36 = vector.extract_strided_slice %33 {offsets = [0, 0], sizes = [8, 8], strides = [1, 1]} : vector<8x32xf32> to vector<8x8xf32>
    %37 = vector.extract_strided_slice %33 {offsets = [0, 8], sizes = [8, 8], strides = [1, 1]} : vector<8x32xf32> to vector<8x8xf32>
    %38 = vector.extract_strided_slice %33 {offsets = [0, 16], sizes = [8, 8], strides = [1, 1]} : vector<8x32xf32> to vector<8x8xf32>
    %39 = vector.extract_strided_slice %33 {offsets = [0, 24], sizes = [8, 8], strides = [1, 1]} : vector<8x32xf32> to vector<8x8xf32>
    %40 = vector.shape_cast %36 : vector<8x8xf32> to vector<1x8x8xf32>
    %41 = vector.shape_cast %37 : vector<8x8xf32> to vector<1x8x8xf32>
    %42 = vector.shape_cast %38 : vector<8x8xf32> to vector<1x8x8xf32>
    %43 = vector.shape_cast %39 : vector<8x8xf32> to vector<1x8x8xf32>
    %44 = tpu.concatenate %40, %41, %42, %43 in 0 : vector<1x8x8xf32>, vector<1x8x8xf32>, vector<1x8x8xf32>, vector<1x8x8xf32> -> vector<4x8x8xf32>
    %45 = vector.extract_strided_slice %34 {offsets = [0, 0], sizes = [8, 8], strides = [1, 1]} : vector<8x32xf32> to vector<8x8xf32>
    %46 = vector.extract_strided_slice %34 {offsets = [0, 8], sizes = [8, 8], strides = [1, 1]} : vector<8x32xf32> to vector<8x8xf32>
    %47 = vector.extract_strided_slice %34 {offsets = [0, 16], sizes = [8, 8], strides = [1, 1]} : vector<8x32xf32> to vector<8x8xf32>
    %48 = vector.extract_strided_slice %34 {offsets = [0, 24], sizes = [8, 8], strides = [1, 1]} : vector<8x32xf32> to vector<8x8xf32>
    %49 = vector.shape_cast %45 : vector<8x8xf32> to vector<1x8x8xf32>
    %50 = vector.shape_cast %46 : vector<8x8xf32> to vector<1x8x8xf32>
    %51 = vector.shape_cast %47 : vector<8x8xf32> to vector<1x8x8xf32>
    %52 = vector.shape_cast %48 : vector<8x8xf32> to vector<1x8x8xf32>
    %53 = tpu.concatenate %49, %50, %51, %52 in 0 : vector<1x8x8xf32>, vector<1x8x8xf32>, vector<1x8x8xf32>, vector<1x8x8xf32> -> vector<4x8x8xf32>
    %54 = vector.extract_strided_slice %35 {offsets = [0, 0], sizes = [8, 8], strides = [1, 1]} : vector<8x32xf32> to vector<8x8xf32>
    %55 = vector.extract_strided_slice %35 {offsets = [0, 8], sizes = [8, 8], strides = [1, 1]} : vector<8x32xf32> to vector<8x8xf32>
    %56 = vector.extract_strided_slice %35 {offsets = [0, 16], sizes = [8, 8], strides = [1, 1]} : vector<8x32xf32> to vector<8x8xf32>
    %57 = vector.extract_strided_slice %35 {offsets = [0, 24], sizes = [8, 8], strides = [1, 1]} : vector<8x32xf32> to vector<8x8xf32>
    %58 = vector.shape_cast %54 : vector<8x8xf32> to vector<1x8x8xf32>
    %59 = vector.shape_cast %55 : vector<8x8xf32> to vector<1x8x8xf32>
    %60 = vector.shape_cast %56 : vector<8x8xf32> to vector<1x8x8xf32>
    %61 = vector.shape_cast %57 : vector<8x8xf32> to vector<1x8x8xf32>
    %62 = tpu.concatenate %58, %59, %60, %61 in 0 : vector<1x8x8xf32>, vector<1x8x8xf32>, vector<1x8x8xf32>, vector<1x8x8xf32> -> vector<4x8x8xf32>
    %63 = arith.truncf %44 : vector<4x8x8xf32> to vector<4x8x8xbf16>
    %64 = arith.truncf %53 : vector<4x8x8xf32> to vector<4x8x8xbf16>
    "tpu.trace_start"() <{level = 10 : i32, message = "hqd,hkd->hqk"}> : () -> ()
    %cst_20 = arith.constant dense<0.000000e+00> : vector<4x8x8xf32>
    %65 = tpu.matmul %63, %64, %cst_20 {dimension_numbers = #tpu.dot_dimension_numbers<[2], [2], [1], [1], [0, 0, 0, 1, 1, 1], [0], [0]>} : vector<4x8x8xbf16>, vector<4x8x8xbf16>, vector<4x8x8xf32> -> vector<4x8x8xf32>
    "tpu.trace_stop"() : () -> ()
    %66 = vector.broadcast %24 : vector<1x1x8xf32> to vector<4x8x8xf32>
    %67 = arith.addf %65, %66 : vector<4x8x8xf32>
    %cst_21 = arith.constant dense<0xFF800000> : vector<4x8xf32>
    %68 = vector.multi_reduction <maximumf>, %67, %cst_21 [2] : vector<4x8x8xf32> to vector<4x8xf32>
    %69 = vector.shape_cast %68 : vector<4x8xf32> to vector<4x8x1xf32>
    %70 = vector.broadcast %69 : vector<4x8x1xf32> to vector<4x8x8xf32>
    %71 = arith.subf %67, %70 : vector<4x8x8xf32>
    %72 = math.exp %71 : vector<4x8x8xf32>
    %cst_22 = arith.constant dense<0.000000e+00> : vector<4x8xf32>
    %73 = vector.multi_reduction <add>, %72, %cst_22 [2] : vector<4x8x8xf32> to vector<4x8xf32>
    %74 = vector.shape_cast %73 : vector<4x8xf32> to vector<4x8x1xf32>
    %75 = tpu.reciprocal %74 {approx = true} : vector<4x8x1xf32> -> vector<4x8x1xf32>
    %76 = vector.broadcast %75 : vector<4x8x1xf32> to vector<4x8x8xf32>
    %77 = arith.mulf %72, %76 : vector<4x8x8xf32>
    %78 = arith.truncf %77 : vector<4x8x8xf32> to vector<4x8x8xbf16>
    %79 = arith.truncf %62 : vector<4x8x8xf32> to vector<4x8x8xbf16>
    "tpu.trace_start"() <{level = 10 : i32, message = "hqk,hkd->hqd"}> : () -> ()
    %cst_23 = arith.constant dense<0.000000e+00> : vector<4x8x8xf32>
    %80 = tpu.matmul %78, %79, %cst_23 {dimension_numbers = #tpu.dot_dimension_numbers<[2], [1], [1], [2], [0, 0, 0, 1, 1, 2], [0], [0]>} : vector<4x8x8xbf16>, vector<4x8x8xbf16>, vector<4x8x8xf32> -> vector<4x8x8xf32>
    "tpu.trace_stop"() : () -> ()
    %81 = vector.extract_strided_slice %80 {offsets = [0, 0, 0], sizes = [1, 8, 8], strides = [1, 1, 1]} : vector<4x8x8xf32> to vector<1x8x8xf32>
    %82 = vector.shape_cast %81 : vector<1x8x8xf32> to vector<8x8xf32>
    %83 = vector.extract_strided_slice %80 {offsets = [1, 0, 0], sizes = [1, 8, 8], strides = [1, 1, 1]} : vector<4x8x8xf32> to vector<1x8x8xf32>
    %84 = vector.shape_cast %83 : vector<1x8x8xf32> to vector<8x8xf32>
    %85 = vector.extract_strided_slice %80 {offsets = [2, 0, 0], sizes = [1, 8, 8], strides = [1, 1, 1]} : vector<4x8x8xf32> to vector<1x8x8xf32>
    %86 = vector.shape_cast %85 : vector<1x8x8xf32> to vector<8x8xf32>
    %87 = vector.extract_strided_slice %80 {offsets = [3, 0, 0], sizes = [1, 8, 8], strides = [1, 1, 1]} : vector<4x8x8xf32> to vector<1x8x8xf32>
    %88 = vector.shape_cast %87 : vector<1x8x8xf32> to vector<8x8xf32>
    %89 = tpu.concatenate %82, %84, %86, %88 in 1 : vector<8x8xf32>, vector<8x8xf32>, vector<8x8xf32>, vector<8x8xf32> -> vector<8x32xf32>
    %90 = arith.truncf %89 : vector<8x32xf32> to vector<8x32xbf16>
    %c0_24 = arith.constant 0 : index
    %c0_25 = arith.constant 0 : index
    %c0_26 = arith.constant 0 : index
    %91 = vector.load %arg7[%c0_24, %c0_25, %c0_26] : memref<2x32x32xbf16, #tpu.memory_space<vmem>>, vector<1x32x32xbf16>
    %92 = vector.shape_cast %91 : vector<1x32x32xbf16> to vector<32x32xbf16>
    %cst_27 = arith.constant dense<0.000000e+00> : vector<8x32xf32>
    %93 = tpu.matmul %90, %92, %cst_27 {dimension_numbers = #tpu.dot_dimension_numbers<[1], [0], [0], [1], [0, 0, 1, 1], [], []>} : vector<8x32xbf16>, vector<32x32xbf16>, vector<8x32xf32> -> vector<8x32xf32>
    %c0_28 = arith.constant 0 : index
    %c0_29 = arith.constant 0 : index
    %c0_30 = arith.constant 0 : index
    %94 = vector.load %arg8[%c0_28, %c0_29, %c0_30] : memref<2x1x32xf32, #tpu.memory_space<vmem>>, vector<1x1x32xf32>
    %95 = vector.shape_cast %94 : vector<1x1x32xf32> to vector<1x32xf32>
    %96 = vector.broadcast %95 : vector<1x32xf32> to vector<8x32xf32>
    %97 = arith.addf %93, %96 : vector<8x32xf32>
    %98 = arith.addf %97, %23 : vector<8x32xf32>
    %c0_31 = arith.constant 0 : index
    %c0_32 = arith.constant 0 : index
    %c0_33 = arith.constant 0 : index
    %99 = vector.load %arg9[%c0_31, %c0_32, %c0_33] : memref<2x1x32xf32, #tpu.memory_space<vmem>>, vector<1x1x32xf32>
    %100 = vector.shape_cast %99 : vector<1x1x32xf32> to vector<1x32xf32>
    %c0_34 = arith.constant 0 : index
    %c0_35 = arith.constant 0 : index
    %c0_36 = arith.constant 0 : index
    %101 = vector.load %arg10[%c0_34, %c0_35, %c0_36] : memref<2x1x32xf32, #tpu.memory_space<vmem>>, vector<1x1x32xf32>
    %102 = vector.shape_cast %101 : vector<1x1x32xf32> to vector<1x32xf32>
    %cst_37 = arith.constant dense<0.000000e+00> : vector<8xf32>
    %103 = vector.multi_reduction <add>, %98, %cst_37 [1] : vector<8x32xf32> to vector<8xf32>
    %104 = vector.shape_cast %103 : vector<8xf32> to vector<8x1xf32>
    %cst_38 = arith.constant 3.200000e+01 : f32
    %105 = vector.broadcast %cst_38 : f32 to vector<8x1xf32>
    %106 = arith.divf %104, %105 : vector<8x1xf32>
    %107 = vector.broadcast %106 : vector<8x1xf32> to vector<8x32xf32>
    %108 = arith.subf %98, %107 : vector<8x32xf32>
    %109 = arith.mulf %108, %108 : vector<8x32xf32>
    %cst_39 = arith.constant dense<0.000000e+00> : vector<8xf32>
    %110 = vector.multi_reduction <add>, %109, %cst_39 [1] : vector<8x32xf32> to vector<8xf32>
    %111 = vector.shape_cast %110 : vector<8xf32> to vector<8x1xf32>
    %cst_40 = arith.constant 3.200000e+01 : f32
    %112 = vector.broadcast %cst_40 : f32 to vector<8x1xf32>
    %113 = arith.divf %111, %112 : vector<8x1xf32>
    %cst_41 = arith.constant 9.99999996E-13 : f32
    %114 = vector.broadcast %cst_41 : f32 to vector<8x1xf32>
    %115 = arith.addf %113, %114 : vector<8x1xf32>
    %116 = math.rsqrt %115 : vector<8x1xf32>
    %117 = vector.broadcast %116 : vector<8x1xf32> to vector<8x32xf32>
    %118 = arith.mulf %108, %117 : vector<8x32xf32>
    %119 = vector.broadcast %100 : vector<1x32xf32> to vector<8x32xf32>
    %120 = arith.mulf %118, %119 : vector<8x32xf32>
    %121 = vector.broadcast %102 : vector<1x32xf32> to vector<8x32xf32>
    %122 = arith.addf %120, %121 : vector<8x32xf32>
    %123 = arith.truncf %122 : vector<8x32xf32> to vector<8x32xbf16>
    %c0_42 = arith.constant 0 : index
    %c0_43 = arith.constant 0 : index
    %c0_44 = arith.constant 0 : index
    %124 = vector.load %arg11[%c0_42, %c0_43, %c0_44] : memref<2x32x64xbf16, #tpu.memory_space<vmem>>, vector<1x32x64xbf16>
    %125 = vector.shape_cast %124 : vector<1x32x64xbf16> to vector<32x64xbf16>
    %cst_45 = arith.constant dense<0.000000e+00> : vector<8x64xf32>
    %126 = tpu.matmul %123, %125, %cst_45 {dimension_numbers = #tpu.dot_dimension_numbers<[1], [0], [0], [1], [0, 0, 1, 1], [], []>} : vector<8x32xbf16>, vector<32x64xbf16>, vector<8x64xf32> -> vector<8x64xf32>
    %c0_46 = arith.constant 0 : index
    %c0_47 = arith.constant 0 : index
    %c0_48 = arith.constant 0 : index
    %127 = vector.load %arg12[%c0_46, %c0_47, %c0_48] : memref<2x1x64xf32, #tpu.memory_space<vmem>>, vector<1x1x64xf32>
    %128 = vector.shape_cast %127 : vector<1x1x64xf32> to vector<1x64xf32>
    %129 = vector.broadcast %128 : vector<1x64xf32> to vector<8x64xf32>
    %130 = arith.addf %126, %129 : vector<8x64xf32>
    %cst_49 = arith.constant 5.000000e-01 : f32
    %131 = vector.broadcast %cst_49 : f32 to vector<8x64xf32>
    %132 = arith.mulf %131, %130 : vector<8x64xf32>
    %cst_50 = arith.constant 4.471500e-02 : f32
    %133 = vector.broadcast %cst_50 : f32 to vector<8x64xf32>
    %134 = arith.mulf %133, %130 : vector<8x64xf32>
    %135 = arith.mulf %134, %130 : vector<8x64xf32>
    %136 = arith.mulf %135, %130 : vector<8x64xf32>
    %137 = arith.addf %130, %136 : vector<8x64xf32>
    %cst_51 = arith.constant 0.797884583 : f32
    %138 = vector.broadcast %cst_51 : f32 to vector<8x64xf32>
    %139 = arith.mulf %138, %137 : vector<8x64xf32>
    %140 = math.tanh %139 : vector<8x64xf32>
    %cst_52 = arith.constant 1.000000e+00 : f32
    %141 = vector.broadcast %cst_52 : f32 to vector<8x64xf32>
    %142 = arith.addf %141, %140 : vector<8x64xf32>
    %143 = arith.mulf %132, %142 : vector<8x64xf32>
    %144 = arith.truncf %143 : vector<8x64xf32> to vector<8x64xbf16>
    %c0_53 = arith.constant 0 : index
    %c0_54 = arith.constant 0 : index
    %c0_55 = arith.constant 0 : index
    %145 = vector.load %arg13[%c0_53, %c0_54, %c0_55] : memref<2x64x32xbf16, #tpu.memory_space<vmem>>, vector<1x64x32xbf16>
    %146 = vector.shape_cast %145 : vector<1x64x32xbf16> to vector<64x32xbf16>
    %cst_56 = arith.constant dense<0.000000e+00> : vector<8x32xf32>
    %147 = tpu.matmul %144, %146, %cst_56 {dimension_numbers = #tpu.dot_dimension_numbers<[1], [0], [0], [1], [0, 0, 1, 1], [], []>} : vector<8x64xbf16>, vector<64x32xbf16>, vector<8x32xf32> -> vector<8x32xf32>
    %c0_57 = arith.constant 0 : index
    %c0_58 = arith.constant 0 : index
    %c0_59 = arith.constant 0 : index
    %148 = vector.load %arg14[%c0_57, %c0_58, %c0_59] : memref<2x1x32xf32, #tpu.memory_space<vmem>>, vector<1x1x32xf32>
    %149 = vector.shape_cast %148 : vector<1x1x32xf32> to vector<1x32xf32>
    %150 = vector.broadcast %149 : vector<1x32xf32> to vector<8x32xf32>
    %151 = arith.addf %147, %150 : vector<8x32xf32>
    %152 = arith.addf %151, %122 : vector<8x32xf32>
    %c0_60 = arith.constant 0 : index
    %c0_61 = arith.constant 0 : index
    %c0_62 = arith.constant 0 : index
    %153 = vector.load %arg15[%c0_60, %c0_61, %c0_62] : memref<2x1x32xf32, #tpu.memory_space<vmem>>, vector<1x1x32xf32>
    %154 = vector.shape_cast %153 : vector<1x1x32xf32> to vector<1x32xf32>
    %c0_63 = arith.constant 0 : index
    %c0_64 = arith.constant 0 : index
    %c0_65 = arith.constant 0 : index
    %155 = vector.load %arg16[%c0_63, %c0_64, %c0_65] : memref<2x1x32xf32, #tpu.memory_space<vmem>>, vector<1x1x32xf32>
    %156 = vector.shape_cast %155 : vector<1x1x32xf32> to vector<1x32xf32>
    %cst_66 = arith.constant dense<0.000000e+00> : vector<8xf32>
    %157 = vector.multi_reduction <add>, %152, %cst_66 [1] : vector<8x32xf32> to vector<8xf32>
    %158 = vector.shape_cast %157 : vector<8xf32> to vector<8x1xf32>
    %cst_67 = arith.constant 3.200000e+01 : f32
    %159 = vector.broadcast %cst_67 : f32 to vector<8x1xf32>
    %160 = arith.divf %158, %159 : vector<8x1xf32>
    %161 = vector.broadcast %160 : vector<8x1xf32> to vector<8x32xf32>
    %162 = arith.subf %152, %161 : vector<8x32xf32>
    %163 = arith.mulf %162, %162 : vector<8x32xf32>
    %cst_68 = arith.constant dense<0.000000e+00> : vector<8xf32>
    %164 = vector.multi_reduction <add>, %163, %cst_68 [1] : vector<8x32xf32> to vector<8xf32>
    %165 = vector.shape_cast %164 : vector<8xf32> to vector<8x1xf32>
    %cst_69 = arith.constant 3.200000e+01 : f32
    %166 = vector.broadcast %cst_69 : f32 to vector<8x1xf32>
    %167 = arith.divf %165, %166 : vector<8x1xf32>
    %cst_70 = arith.constant 9.99999996E-13 : f32
    %168 = vector.broadcast %cst_70 : f32 to vector<8x1xf32>
    %169 = arith.addf %167, %168 : vector<8x1xf32>
    %170 = math.rsqrt %169 : vector<8x1xf32>
    %171 = vector.broadcast %170 : vector<8x1xf32> to vector<8x32xf32>
    %172 = arith.mulf %162, %171 : vector<8x32xf32>
    %173 = vector.broadcast %154 : vector<1x32xf32> to vector<8x32xf32>
    %174 = arith.mulf %172, %173 : vector<8x32xf32>
    %175 = vector.broadcast %156 : vector<1x32xf32> to vector<8x32xf32>
    %176 = arith.addf %174, %175 : vector<8x32xf32>
    %177 = arith.truncf %176 : vector<8x32xf32> to vector<8x32xbf16>
    %c1 = arith.constant 1 : index
    %c0_71 = arith.constant 0 : index
    %c0_72 = arith.constant 0 : index
    %178 = vector.load %arg5[%c1, %c0_71, %c0_72] : memref<2x32x96xbf16, #tpu.memory_space<vmem>>, vector<1x32x96xbf16>
    %179 = vector.shape_cast %178 : vector<1x32x96xbf16> to vector<32x96xbf16>
    %cst_73 = arith.constant dense<0.000000e+00> : vector<8x96xf32>
    %180 = tpu.matmul %177, %179, %cst_73 {dimension_numbers = #tpu.dot_dimension_numbers<[1], [0], [0], [1], [0, 0, 1, 1], [], []>} : vector<8x32xbf16>, vector<32x96xbf16>, vector<8x96xf32> -> vector<8x96xf32>
    %c1_74 = arith.constant 1 : index
    %c0_75 = arith.constant 0 : index
    %c0_76 = arith.constant 0 : index
    %181 = vector.load %arg6[%c1_74, %c0_75, %c0_76] : memref<2x1x96xf32, #tpu.memory_space<vmem>>, vector<1x1x96xf32>
    %182 = vector.shape_cast %181 : vector<1x1x96xf32> to vector<1x96xf32>
    %183 = vector.broadcast %182 : vector<1x96xf32> to vector<8x96xf32>
    %184 = arith.addf %180, %183 : vector<8x96xf32>
    %185 = vector.extract_strided_slice %184 {offsets = [0, 0], sizes = [8, 32], strides = [1, 1]} : vector<8x96xf32> to vector<8x32xf32>
    %186 = vector.extract_strided_slice %184 {offsets = [0, 32], sizes = [8, 32], strides = [1, 1]} : vector<8x96xf32> to vector<8x32xf32>
    %187 = vector.extract_strided_slice %184 {offsets = [0, 64], sizes = [8, 32], strides = [1, 1]} : vector<8x96xf32> to vector<8x32xf32>
    %188 = vector.extract_strided_slice %185 {offsets = [0, 0], sizes = [8, 8], strides = [1, 1]} : vector<8x32xf32> to vector<8x8xf32>
    %189 = vector.extract_strided_slice %185 {offsets = [0, 8], sizes = [8, 8], strides = [1, 1]} : vector<8x32xf32> to vector<8x8xf32>
    %190 = vector.extract_strided_slice %185 {offsets = [0, 16], sizes = [8, 8], strides = [1, 1]} : vector<8x32xf32> to vector<8x8xf32>
    %191 = vector.extract_strided_slice %185 {offsets = [0, 24], sizes = [8, 8], strides = [1, 1]} : vector<8x32xf32> to vector<8x8xf32>
    %192 = vector.shape_cast %188 : vector<8x8xf32> to vector<1x8x8xf32>
    %193 = vector.shape_cast %189 : vector<8x8xf32> to vector<1x8x8xf32>
    %194 = vector.shape_cast %190 : vector<8x8xf32> to vector<1x8x8xf32>
    %195 = vector.shape_cast %191 : vector<8x8xf32> to vector<1x8x8xf32>
    %196 = tpu.concatenate %192, %193, %194, %195 in 0 : vector<1x8x8xf32>, vector<1x8x8xf32>, vector<1x8x8xf32>, vector<1x8x8xf32> -> vector<4x8x8xf32>
    %197 = vector.extract_strided_slice %186 {offsets = [0, 0], sizes = [8, 8], strides = [1, 1]} : vector<8x32xf32> to vector<8x8xf32>
    %198 = vector.extract_strided_slice %186 {offsets = [0, 8], sizes = [8, 8], strides = [1, 1]} : vector<8x32xf32> to vector<8x8xf32>
    %199 = vector.extract_strided_slice %186 {offsets = [0, 16], sizes = [8, 8], strides = [1, 1]} : vector<8x32xf32> to vector<8x8xf32>
    %200 = vector.extract_strided_slice %186 {offsets = [0, 24], sizes = [8, 8], strides = [1, 1]} : vector<8x32xf32> to vector<8x8xf32>
    %201 = vector.shape_cast %197 : vector<8x8xf32> to vector<1x8x8xf32>
    %202 = vector.shape_cast %198 : vector<8x8xf32> to vector<1x8x8xf32>
    %203 = vector.shape_cast %199 : vector<8x8xf32> to vector<1x8x8xf32>
    %204 = vector.shape_cast %200 : vector<8x8xf32> to vector<1x8x8xf32>
    %205 = tpu.concatenate %201, %202, %203, %204 in 0 : vector<1x8x8xf32>, vector<1x8x8xf32>, vector<1x8x8xf32>, vector<1x8x8xf32> -> vector<4x8x8xf32>
    %206 = vector.extract_strided_slice %187 {offsets = [0, 0], sizes = [8, 8], strides = [1, 1]} : vector<8x32xf32> to vector<8x8xf32>
    %207 = vector.extract_strided_slice %187 {offsets = [0, 8], sizes = [8, 8], strides = [1, 1]} : vector<8x32xf32> to vector<8x8xf32>
    %208 = vector.extract_strided_slice %187 {offsets = [0, 16], sizes = [8, 8], strides = [1, 1]} : vector<8x32xf32> to vector<8x8xf32>
    %209 = vector.extract_strided_slice %187 {offsets = [0, 24], sizes = [8, 8], strides = [1, 1]} : vector<8x32xf32> to vector<8x8xf32>
    %210 = vector.shape_cast %206 : vector<8x8xf32> to vector<1x8x8xf32>
    %211 = vector.shape_cast %207 : vector<8x8xf32> to vector<1x8x8xf32>
    %212 = vector.shape_cast %208 : vector<8x8xf32> to vector<1x8x8xf32>
    %213 = vector.shape_cast %209 : vector<8x8xf32> to vector<1x8x8xf32>
    %214 = tpu.concatenate %210, %211, %212, %213 in 0 : vector<1x8x8xf32>, vector<1x8x8xf32>, vector<1x8x8xf32>, vector<1x8x8xf32> -> vector<4x8x8xf32>
    %215 = arith.truncf %196 : vector<4x8x8xf32> to vector<4x8x8xbf16>
    %216 = arith.truncf %205 : vector<4x8x8xf32> to vector<4x8x8xbf16>
    "tpu.trace_start"() <{level = 10 : i32, message = "hqd,hkd->hqk"}> : () -> ()
    %cst_77 = arith.constant dense<0.000000e+00> : vector<4x8x8xf32>
    %217 = tpu.matmul %215, %216, %cst_77 {dimension_numbers = #tpu.dot_dimension_numbers<[2], [2], [1], [1], [0, 0, 0, 1, 1, 1], [0], [0]>} : vector<4x8x8xbf16>, vector<4x8x8xbf16>, vector<4x8x8xf32> -> vector<4x8x8xf32>
    "tpu.trace_stop"() : () -> ()
    %218 = vector.broadcast %24 : vector<1x1x8xf32> to vector<4x8x8xf32>
    %219 = arith.addf %217, %218 : vector<4x8x8xf32>
    %cst_78 = arith.constant dense<0xFF800000> : vector<4x8xf32>
    %220 = vector.multi_reduction <maximumf>, %219, %cst_78 [2] : vector<4x8x8xf32> to vector<4x8xf32>
    %221 = vector.shape_cast %220 : vector<4x8xf32> to vector<4x8x1xf32>
    %222 = vector.broadcast %221 : vector<4x8x1xf32> to vector<4x8x8xf32>
    %223 = arith.subf %219, %222 : vector<4x8x8xf32>
    %224 = math.exp %223 : vector<4x8x8xf32>
    %cst_79 = arith.constant dense<0.000000e+00> : vector<4x8xf32>
    %225 = vector.multi_reduction <add>, %224, %cst_79 [2] : vector<4x8x8xf32> to vector<4x8xf32>
    %226 = vector.shape_cast %225 : vector<4x8xf32> to vector<4x8x1xf32>
    %227 = tpu.reciprocal %226 {approx = true} : vector<4x8x1xf32> -> vector<4x8x1xf32>
    %228 = vector.broadcast %227 : vector<4x8x1xf32> to vector<4x8x8xf32>
    %229 = arith.mulf %224, %228 : vector<4x8x8xf32>
    %230 = arith.truncf %229 : vector<4x8x8xf32> to vector<4x8x8xbf16>
    %231 = arith.truncf %214 : vector<4x8x8xf32> to vector<4x8x8xbf16>
    "tpu.trace_start"() <{level = 10 : i32, message = "hqk,hkd->hqd"}> : () -> ()
    %cst_80 = arith.constant dense<0.000000e+00> : vector<4x8x8xf32>
    %232 = tpu.matmul %230, %231, %cst_80 {dimension_numbers = #tpu.dot_dimension_numbers<[2], [1], [1], [2], [0, 0, 0, 1, 1, 2], [0], [0]>} : vector<4x8x8xbf16>, vector<4x8x8xbf16>, vector<4x8x8xf32> -> vector<4x8x8xf32>
    "tpu.trace_stop"() : () -> ()
    %233 = vector.extract_strided_slice %232 {offsets = [0, 0, 0], sizes = [1, 8, 8], strides = [1, 1, 1]} : vector<4x8x8xf32> to vector<1x8x8xf32>
    %234 = vector.shape_cast %233 : vector<1x8x8xf32> to vector<8x8xf32>
    %235 = vector.extract_strided_slice %232 {offsets = [1, 0, 0], sizes = [1, 8, 8], strides = [1, 1, 1]} : vector<4x8x8xf32> to vector<1x8x8xf32>
    %236 = vector.shape_cast %235 : vector<1x8x8xf32> to vector<8x8xf32>
    %237 = vector.extract_strided_slice %232 {offsets = [2, 0, 0], sizes = [1, 8, 8], strides = [1, 1, 1]} : vector<4x8x8xf32> to vector<1x8x8xf32>
    %238 = vector.shape_cast %237 : vector<1x8x8xf32> to vector<8x8xf32>
    %239 = vector.extract_strided_slice %232 {offsets = [3, 0, 0], sizes = [1, 8, 8], strides = [1, 1, 1]} : vector<4x8x8xf32> to vector<1x8x8xf32>
    %240 = vector.shape_cast %239 : vector<1x8x8xf32> to vector<8x8xf32>
    %241 = tpu.concatenate %234, %236, %238, %240 in 1 : vector<8x8xf32>, vector<8x8xf32>, vector<8x8xf32>, vector<8x8xf32> -> vector<8x32xf32>
    %242 = arith.truncf %241 : vector<8x32xf32> to vector<8x32xbf16>
    %c1_81 = arith.constant 1 : index
    %c0_82 = arith.constant 0 : index
    %c0_83 = arith.constant 0 : index
    %243 = vector.load %arg7[%c1_81, %c0_82, %c0_83] : memref<2x32x32xbf16, #tpu.memory_space<vmem>>, vector<1x32x32xbf16>
    %244 = vector.shape_cast %243 : vector<1x32x32xbf16> to vector<32x32xbf16>
    %cst_84 = arith.constant dense<0.000000e+00> : vector<8x32xf32>
    %245 = tpu.matmul %242, %244, %cst_84 {dimension_numbers = #tpu.dot_dimension_numbers<[1], [0], [0], [1], [0, 0, 1, 1], [], []>} : vector<8x32xbf16>, vector<32x32xbf16>, vector<8x32xf32> -> vector<8x32xf32>
    %c1_85 = arith.constant 1 : index
    %c0_86 = arith.constant 0 : index
    %c0_87 = arith.constant 0 : index
    %246 = vector.load %arg8[%c1_85, %c0_86, %c0_87] : memref<2x1x32xf32, #tpu.memory_space<vmem>>, vector<1x1x32xf32>
    %247 = vector.shape_cast %246 : vector<1x1x32xf32> to vector<1x32xf32>
    %248 = vector.broadcast %247 : vector<1x32xf32> to vector<8x32xf32>
    %249 = arith.addf %245, %248 : vector<8x32xf32>
    %250 = arith.addf %249, %176 : vector<8x32xf32>
    %c1_88 = arith.constant 1 : index
    %c0_89 = arith.constant 0 : index
    %c0_90 = arith.constant 0 : index
    %251 = vector.load %arg9[%c1_88, %c0_89, %c0_90] : memref<2x1x32xf32, #tpu.memory_space<vmem>>, vector<1x1x32xf32>
    %252 = vector.shape_cast %251 : vector<1x1x32xf32> to vector<1x32xf32>
    %c1_91 = arith.constant 1 : index
    %c0_92 = arith.constant 0 : index
    %c0_93 = arith.constant 0 : index
    %253 = vector.load %arg10[%c1_91, %c0_92, %c0_93] : memref<2x1x32xf32, #tpu.memory_space<vmem>>, vector<1x1x32xf32>
    %254 = vector.shape_cast %253 : vector<1x1x32xf32> to vector<1x32xf32>
    %cst_94 = arith.constant dense<0.000000e+00> : vector<8xf32>
    %255 = vector.multi_reduction <add>, %250, %cst_94 [1] : vector<8x32xf32> to vector<8xf32>
    %256 = vector.shape_cast %255 : vector<8xf32> to vector<8x1xf32>
    %cst_95 = arith.constant 3.200000e+01 : f32
    %257 = vector.broadcast %cst_95 : f32 to vector<8x1xf32>
    %258 = arith.divf %256, %257 : vector<8x1xf32>
    %259 = vector.broadcast %258 : vector<8x1xf32> to vector<8x32xf32>
    %260 = arith.subf %250, %259 : vector<8x32xf32>
    %261 = arith.mulf %260, %260 : vector<8x32xf32>
    %cst_96 = arith.constant dense<0.000000e+00> : vector<8xf32>
    %262 = vector.multi_reduction <add>, %261, %cst_96 [1] : vector<8x32xf32> to vector<8xf32>
    %263 = vector.shape_cast %262 : vector<8xf32> to vector<8x1xf32>
    %cst_97 = arith.constant 3.200000e+01 : f32
    %264 = vector.broadcast %cst_97 : f32 to vector<8x1xf32>
    %265 = arith.divf %263, %264 : vector<8x1xf32>
    %cst_98 = arith.constant 9.99999996E-13 : f32
    %266 = vector.broadcast %cst_98 : f32 to vector<8x1xf32>
    %267 = arith.addf %265, %266 : vector<8x1xf32>
    %268 = math.rsqrt %267 : vector<8x1xf32>
    %269 = vector.broadcast %268 : vector<8x1xf32> to vector<8x32xf32>
    %270 = arith.mulf %260, %269 : vector<8x32xf32>
    %271 = vector.broadcast %252 : vector<1x32xf32> to vector<8x32xf32>
    %272 = arith.mulf %270, %271 : vector<8x32xf32>
    %273 = vector.broadcast %254 : vector<1x32xf32> to vector<8x32xf32>
    %274 = arith.addf %272, %273 : vector<8x32xf32>
    %275 = arith.truncf %274 : vector<8x32xf32> to vector<8x32xbf16>
    %c1_99 = arith.constant 1 : index
    %c0_100 = arith.constant 0 : index
    %c0_101 = arith.constant 0 : index
    %276 = vector.load %arg11[%c1_99, %c0_100, %c0_101] : memref<2x32x64xbf16, #tpu.memory_space<vmem>>, vector<1x32x64xbf16>
    %277 = vector.shape_cast %276 : vector<1x32x64xbf16> to vector<32x64xbf16>
    %cst_102 = arith.constant dense<0.000000e+00> : vector<8x64xf32>
    %278 = tpu.matmul %275, %277, %cst_102 {dimension_numbers = #tpu.dot_dimension_numbers<[1], [0], [0], [1], [0, 0, 1, 1], [], []>} : vector<8x32xbf16>, vector<32x64xbf16>, vector<8x64xf32> -> vector<8x64xf32>
    %c1_103 = arith.constant 1 : index
    %c0_104 = arith.constant 0 : index
    %c0_105 = arith.constant 0 : index
    %279 = vector.load %arg12[%c1_103, %c0_104, %c0_105] : memref<2x1x64xf32, #tpu.memory_space<vmem>>, vector<1x1x64xf32>
    %280 = vector.shape_cast %279 : vector<1x1x64xf32> to vector<1x64xf32>
    %281 = vector.broadcast %280 : vector<1x64xf32> to vector<8x64xf32>
    %282 = arith.addf %278, %281 : vector<8x64xf32>
    %cst_106 = arith.constant 5.000000e-01 : f32
    %283 = vector.broadcast %cst_106 : f32 to vector<8x64xf32>
    %284 = arith.mulf %283, %282 : vector<8x64xf32>
    %cst_107 = arith.constant 4.471500e-02 : f32
    %285 = vector.broadcast %cst_107 : f32 to vector<8x64xf32>
    %286 = arith.mulf %285, %282 : vector<8x64xf32>
    %287 = arith.mulf %286, %282 : vector<8x64xf32>
    %288 = arith.mulf %287, %282 : vector<8x64xf32>
    %289 = arith.addf %282, %288 : vector<8x64xf32>
    %cst_108 = arith.constant 0.797884583 : f32
    %290 = vector.broadcast %cst_108 : f32 to vector<8x64xf32>
    %291 = arith.mulf %290, %289 : vector<8x64xf32>
    %292 = math.tanh %291 : vector<8x64xf32>
    %cst_109 = arith.constant 1.000000e+00 : f32
    %293 = vector.broadcast %cst_109 : f32 to vector<8x64xf32>
    %294 = arith.addf %293, %292 : vector<8x64xf32>
    %295 = arith.mulf %284, %294 : vector<8x64xf32>
    %296 = arith.truncf %295 : vector<8x64xf32> to vector<8x64xbf16>
    %c1_110 = arith.constant 1 : index
    %c0_111 = arith.constant 0 : index
    %c0_112 = arith.constant 0 : index
    %297 = vector.load %arg13[%c1_110, %c0_111, %c0_112] : memref<2x64x32xbf16, #tpu.memory_space<vmem>>, vector<1x64x32xbf16>
    %298 = vector.shape_cast %297 : vector<1x64x32xbf16> to vector<64x32xbf16>
    %cst_113 = arith.constant dense<0.000000e+00> : vector<8x32xf32>
    %299 = tpu.matmul %296, %298, %cst_113 {dimension_numbers = #tpu.dot_dimension_numbers<[1], [0], [0], [1], [0, 0, 1, 1], [], []>} : vector<8x64xbf16>, vector<64x32xbf16>, vector<8x32xf32> -> vector<8x32xf32>
    %c1_114 = arith.constant 1 : index
    %c0_115 = arith.constant 0 : index
    %c0_116 = arith.constant 0 : index
    %300 = vector.load %arg14[%c1_114, %c0_115, %c0_116] : memref<2x1x32xf32, #tpu.memory_space<vmem>>, vector<1x1x32xf32>
    %301 = vector.shape_cast %300 : vector<1x1x32xf32> to vector<1x32xf32>
    %302 = vector.broadcast %301 : vector<1x32xf32> to vector<8x32xf32>
    %303 = arith.addf %299, %302 : vector<8x32xf32>
    %304 = arith.addf %303, %274 : vector<8x32xf32>
    %c1_117 = arith.constant 1 : index
    %c0_118 = arith.constant 0 : index
    %c0_119 = arith.constant 0 : index
    %305 = vector.load %arg15[%c1_117, %c0_118, %c0_119] : memref<2x1x32xf32, #tpu.memory_space<vmem>>, vector<1x1x32xf32>
    %306 = vector.shape_cast %305 : vector<1x1x32xf32> to vector<1x32xf32>
    %c1_120 = arith.constant 1 : index
    %c0_121 = arith.constant 0 : index
    %c0_122 = arith.constant 0 : index
    %307 = vector.load %arg16[%c1_120, %c0_121, %c0_122] : memref<2x1x32xf32, #tpu.memory_space<vmem>>, vector<1x1x32xf32>
    %308 = vector.shape_cast %307 : vector<1x1x32xf32> to vector<1x32xf32>
    %cst_123 = arith.constant dense<0.000000e+00> : vector<8xf32>
    %309 = vector.multi_reduction <add>, %304, %cst_123 [1] : vector<8x32xf32> to vector<8xf32>
    %310 = vector.shape_cast %309 : vector<8xf32> to vector<8x1xf32>
    %cst_124 = arith.constant 3.200000e+01 : f32
    %311 = vector.broadcast %cst_124 : f32 to vector<8x1xf32>
    %312 = arith.divf %310, %311 : vector<8x1xf32>
    %313 = vector.broadcast %312 : vector<8x1xf32> to vector<8x32xf32>
    %314 = arith.subf %304, %313 : vector<8x32xf32>
    %315 = arith.mulf %314, %314 : vector<8x32xf32>
    %cst_125 = arith.constant dense<0.000000e+00> : vector<8xf32>
    %316 = vector.multi_reduction <add>, %315, %cst_125 [1] : vector<8x32xf32> to vector<8xf32>
    %317 = vector.shape_cast %316 : vector<8xf32> to vector<8x1xf32>
    %cst_126 = arith.constant 3.200000e+01 : f32
    %318 = vector.broadcast %cst_126 : f32 to vector<8x1xf32>
    %319 = arith.divf %317, %318 : vector<8x1xf32>
    %cst_127 = arith.constant 9.99999996E-13 : f32
    %320 = vector.broadcast %cst_127 : f32 to vector<8x1xf32>
    %321 = arith.addf %319, %320 : vector<8x1xf32>
    %322 = math.rsqrt %321 : vector<8x1xf32>
    %323 = vector.broadcast %322 : vector<8x1xf32> to vector<8x32xf32>
    %324 = arith.mulf %314, %323 : vector<8x32xf32>
    %325 = vector.broadcast %306 : vector<1x32xf32> to vector<8x32xf32>
    %326 = arith.mulf %324, %325 : vector<8x32xf32>
    %327 = vector.broadcast %308 : vector<1x32xf32> to vector<8x32xf32>
    %328 = arith.addf %326, %327 : vector<8x32xf32>
    %c0_128 = arith.constant 0 : index
    %c0_129 = arith.constant 0 : index
    %c0_130 = arith.constant 0 : index
    %329 = vector.load %arg17[%c0_128, %c0_129, %c0_130] : memref<1x8x32xf32, #tpu.memory_space<vmem>>, vector<1x8x32xf32>
    %330 = vector.shape_cast %329 : vector<1x8x32xf32> to vector<8x32xf32>
    %331 = vector.shape_cast %328 : vector<8x32xf32> to vector<1x8x32xf32>
    tpu.vector_store %arg17[%c0_128, %c0_129, %c0_130], %331 {strides = array<i32>} : memref<1x8x32xf32, #tpu.memory_space<vmem>>, vector<1x8x32xf32>,
    return
  }
  func.func @transform_0(%arg0: i32) -> (i32, i32, i32) {
    %c0_i32 = arith.constant 0 : i32
    %c0_i32_0 = arith.constant 0 : i32
    %c0_i32_1 = arith.constant 0 : i32
    return %arg0, %c0_i32, %c0_i32_0 : i32, i32, i32
  }
  func.func @transform_1(%arg0: i32) -> (i32, i32, i32) {
    %c0_i32 = arith.constant 0 : i32
    %c0_i32_0 = arith.constant 0 : i32
    %c0_i32_1 = arith.constant 0 : i32
    return %arg0, %c0_i32, %c0_i32_0 : i32, i32, i32
  }
  func.func @transform_2(%arg0: i32) -> (i32, i32) {
    %c0_i32 = arith.constant 0 : i32
    %c0_i32_0 = arith.constant 0 : i32
    %c0_i32_1 = arith.constant 0 : i32
    return %c0_i32, %c0_i32_0 : i32, i32
  }
  func.func @transform_3(%arg0: i32) -> (i32, i32) {
    %c0_i32 = arith.constant 0 : i32
    %c0_i32_0 = arith.constant 0 : i32
    %c0_i32_1 = arith.constant 0 : i32
    return %c0_i32, %c0_i32_0 : i32, i32
  }
  func.func @transform_4(%arg0: i32) -> (i32, i32, i32) {
    %c0_i32 = arith.constant 0 : i32
    %c0_i32_0 = arith.constant 0 : i32
    %c0_i32_1 = arith.constant 0 : i32
    %c0_i32_2 = arith.constant 0 : i32
    return %c0_i32, %c0_i32_0, %c0_i32_1 : i32, i32, i32
  }
  func.func @transform_5(%arg0: i32) -> (i32, i32, i32) {
    %c0_i32 = arith.constant 0 : i32
    %c0_i32_0 = arith.constant 0 : i32
    %c0_i32_1 = arith.constant 0 : i32
    %c0_i32_2 = arith.constant 0 : i32
    return %c0_i32, %c0_i32_0, %c0_i32_1 : i32, i32, i32
  }
  func.func @transform_6(%arg0: i32) -> (i32, i32, i32) {
    %c0_i32 = arith.constant 0 : i32
    %c0_i32_0 = arith.constant 0 : i32
    %c0_i32_1 = arith.constant 0 : i32
    %c0_i32_2 = arith.constant 0 : i32
    return %c0_i32, %c0_i32_0, %c0_i32_1 : i32, i32, i32
  }
  func.func @transform_7(%arg0: i32) -> (i32, i32, i32) {
    %c0_i32 = arith.constant 0 : i32
    %c0_i32_0 = arith.constant 0 : i32
    %c0_i32_1 = arith.constant 0 : i32
    %c0_i32_2 = arith.constant 0 : i32
    return %c0_i32, %c0_i32_0, %c0_i32_1 : i32, i32, i32
  }
  func.func @transform_8(%arg0: i32) -> (i32, i32, i32) {
    %c0_i32 = arith.constant 0 : i32
    %c0_i32_0 = arith.constant 0 : i32
    %c0_i32_1 = arith.constant 0 : i32
    %c0_i32_2 = arith.constant 0 : i32
    return %c0_i32, %c0_i32_0, %c0_i32_1 : i32, i32, i32
  }
  func.func @transform_9(%arg0: i32) -> (i32, i32, i32) {
    %c0_i32 = arith.constant 0 : i32
    %c0_i32_0 = arith.constant 0 : i32
    %c0_i32_1 = arith.constant 0 : i32
    %c0_i32_2 = arith.constant 0 : i32
    return %c0_i32, %c0_i32_0, %c0_i32_1 : i32, i32, i32
  }
  func.func @transform_10(%arg0: i32) -> (i32, i32, i32) {
    %c0_i32 = arith.constant 0 : i32
    %c0_i32_0 = arith.constant 0 : i32
    %c0_i32_1 = arith.constant 0 : i32
    %c0_i32_2 = arith.constant 0 : i32
    return %c0_i32, %c0_i32_0, %c0_i32_1 : i32, i32, i32
  }
  func.func @transform_11(%arg0: i32) -> (i32, i32, i32) {
    %c0_i32 = arith.constant 0 : i32
    %c0_i32_0 = arith.constant 0 : i32
    %c0_i32_1 = arith.constant 0 : i32
    %c0_i32_2 = arith.constant 0 : i32
    return %c0_i32, %c0_i32_0, %c0_i32_1 : i32, i32, i32
  }
  func.func @transform_12(%arg0: i32) -> (i32, i32, i32) {
    %c0_i32 = arith.constant 0 : i32
    %c0_i32_0 = arith.constant 0 : i32
    %c0_i32_1 = arith.constant 0 : i32
    %c0_i32_2 = arith.constant 0 : i32
    return %c0_i32, %c0_i32_0, %c0_i32_1 : i32, i32, i32
  }
  func.func @transform_13(%arg0: i32) -> (i32, i32, i32) {
    %c0_i32 = arith.constant 0 : i32
    %c0_i32_0 = arith.constant 0 : i32
    %c0_i32_1 = arith.constant 0 : i32
    %c0_i32_2 = arith.constant 0 : i32
    return %c0_i32, %c0_i32_0, %c0_i32_1 : i32, i32, i32
  }
  func.func @transform_14(%arg0: i32) -> (i32, i32, i32) {
    %c0_i32 = arith.constant 0 : i32
    %c0_i32_0 = arith.constant 0 : i32
    %c0_i32_1 = arith.constant 0 : i32
    %c0_i32_2 = arith.constant 0 : i32
    return %c0_i32, %c0_i32_0, %c0_i32_1 : i32, i32, i32
  }
  func.func @transform_15(%arg0: i32) -> (i32, i32, i32) {
    %c0_i32 = arith.constant 0 : i32
    %c0_i32_0 = arith.constant 0 : i32
    %c0_i32_1 = arith.constant 0 : i32
    %c0_i32_2 = arith.constant 0 : i32
    return %c0_i32, %c0_i32_0, %c0_i32_1 : i32, i32, i32
  }
  func.func @transform_16(%arg0: i32) -> (i32, i32, i32) {
    %c0_i32 = arith.constant 0 : i32
    %c0_i32_0 = arith.constant 0 : i32
    %c0_i32_1 = arith.constant 0 : i32
    return %arg0, %c0_i32, %c0_i32_0 : i32, i32, i32
  }
}

</mosaic_0001>

<llo_original>
// kernel: bert_forward.1
$region0: #{bert_forward.1}
  #allocation0 [shape = 'u32[]', space=smem, size = 0x4, offset = 0x4, fixed_abs, tag = 'smem constant byte address 0x4 - core index']
  #allocation1 [shape = 'u32[144,128]{1,0:T(1,128)}', space=vmem, size = 0x12000, scoped, tag = 'internal scratch']
  %s0 = inlined_call_operand.vmem [shape: f32[2,8,32], index: 0, kind: input, shape index: {}]
  %s1 = inlined_call_operand.vmem [shape: f32[2,1,8], index: 1, kind: input, shape index: {}]
  %s2 = inlined_call_operand.vmem [shape: f32[1,32], index: 2, kind: input, shape index: {}]
  %s3 = inlined_call_operand.vmem [shape: f32[1,32], index: 3, kind: input, shape index: {}]
  %s4 = inlined_call_operand.vmem [shape: bf16[2,32,96], index: 4, kind: input, shape index: {}]
  %s5 = inlined_call_operand.vmem [shape: f32[2,1,96], index: 5, kind: input, shape index: {}]
  %s6 = inlined_call_operand.vmem [shape: bf16[2,32,32], index: 6, kind: input, shape index: {}]
  %s7 = inlined_call_operand.vmem [shape: f32[2,1,32], index: 7, kind: input, shape index: {}]
  %s8 = inlined_call_operand.vmem [shape: f32[2,1,32], index: 8, kind: input, shape index: {}]
  %s9 = inlined_call_operand.vmem [shape: f32[2,1,32], index: 9, kind: input, shape index: {}]
  %s10 = inlined_call_operand.vmem [shape: bf16[2,32,64], index: 10, kind: input, shape index: {}]
  %s11 = inlined_call_operand.vmem [shape: f32[2,1,64], index: 11, kind: input, shape index: {}]
  %s12 = inlined_call_operand.vmem [shape: bf16[2,64,32], index: 12, kind: input, shape index: {}]
  %s13 = inlined_call_operand.vmem [shape: f32[2,1,32], index: 13, kind: input, shape index: {}]
  %s14 = inlined_call_operand.vmem [shape: f32[2,1,32], index: 14, kind: input, shape index: {}]
  %s15 = inlined_call_operand.vmem [shape: f32[2,1,32], index: 15, kind: input, shape index: {}]
  %s16 = inlined_call_operand.hbm [shape: f32[2,8,32], index: 16, kind: output, shape index: {}]
  %s17 = sld [smem:[#allocation0]]
  $region97: #{bert_forward.1} parent=0
    _
  %s19 = ssub.s32 1, %s17
  %s20 = scalar_select 0, %s19, %s17
  $region1: #{bert_forward.1} parent=0
    #allocation2 [shape = 'u8[8192]{0}', space=vmem, size = 0x2000, scoped, tag = 'output window, operand 0']
    #allocation3 [shape = 's32[2]{0}', space=sflag, size = 0x8, scoped, tag = 'scoped memory for bert_forward.1']
    %21 = vsyncpa [#allocation3], 0
    %s22 = scalar_lea.sflag [#allocation3], 1
    %23 = vsyncpa %s22, 0
    loop: start=0, step=1, limit=4
    $region2: #{bert_forward.1} parent=1 // loop_pre_header
      _
    $region3: #{bert_forward.1} parent=1 // loop_header
      %s25 = sphi 0, %s29
      %p26 = scmp.ge.s32.totalorder %s25, 4
      %s35 = sphi 0, %s37
      %s38 = sphi 0, %s35
      %s39 = sphi 0, %s38
      %s55 = sphi 0, %s39
      %s61 = sphi 0, %s63
      %s64 = sphi 0, %s61
      %s65 = sphi 0, %s64
      %s81 = sphi 0, %s65
      %s85 = sphi 0, %s85
      %s87 = sphi 0, %s85
      %s88 = sphi 0, %s87
      %s102 = sphi 0, %s88
      %s106 = sphi 0, %s106
      %s108 = sphi 0, %s106
      %s109 = sphi 0, %s108
      %s123 = sphi 0, %s109
      %s127 = sphi 0, %s127
      %s129 = sphi 0, %s127
      %s130 = sphi 0, %s129
      %s144 = sphi 0, %s130
      %s148 = sphi 0, %s148
      %s150 = sphi 0, %s148
      %s151 = sphi 0, %s150
      %s165 = sphi 0, %s151
      %s169 = sphi 0, %s169
      %s171 = sphi 0, %s169
      %s172 = sphi 0, %s171
      %s186 = sphi 0, %s172
      %s190 = sphi 0, %s190
      %s192 = sphi 0, %s190
      %s193 = sphi 0, %s192
      %s207 = sphi 0, %s193
      %s211 = sphi 0, %s211
      %s213 = sphi 0, %s211
      %s214 = sphi 0, %s213
      %s228 = sphi 0, %s214
      %s232 = sphi 0, %s232
      %s234 = sphi 0, %s232
      %s235 = sphi 0, %s234
      %s249 = sphi 0, %s235
      %s253 = sphi 0, %s253
      %s255 = sphi 0, %s253
      %s256 = sphi 0, %s255
      %s270 = sphi 0, %s256
      %s274 = sphi 0, %s274
      %s276 = sphi 0, %s274
      %s277 = sphi 0, %s276
      %s291 = sphi 0, %s277
      %s295 = sphi 0, %s295
      %s297 = sphi 0, %s295
      %s298 = sphi 0, %s297
      %s312 = sphi 0, %s298
      %s316 = sphi 0, %s316
      %s318 = sphi 0, %s316
      %s319 = sphi 0, %s318
      %s333 = sphi 0, %s319
      %s337 = sphi 0, %s337
      %s339 = sphi 0, %s337
      %s340 = sphi 0, %s339
      %s354 = sphi 0, %s340
      %s358 = sphi 0, %s358
      %s360 = sphi 0, %s358
      %s361 = sphi 0, %s360
      %s375 = sphi 0, %s361
      %s381 = sphi 0, %s383
      %s384 = sphi 0, %s381
      %s385 = sphi 0, %s384
      %s401 = sphi 0, %s385
    $region4: #{bert_forward.1} parent=1 // loop_header_branch
      %28 = sbr.rel (%p26) target = $region8
    $region5: #{bert_forward.1} parent=1 // loop_body
      %s30 = ssub.s32 %s25, 1
      %s31 = ssub.s32 %s25, 2
      %s32 = sadd.s32 %s25, 1
      %s33 = ssub.s32 %s25, %s32
      %p34 = scmp.eq.s32.totalorder %s33, 0
      %s36 = sadd.s32 %s35, 1
      %s37 = scalar_select %p34, %s35, %s36
      %p40 = pneg %p34
      %p41 = scmp.eq.s32.totalorder %s25, 1
      %p42 = por %p40, %p41
      %p43 = scmp.ne.s32.totalorder %s35, %s38
      %p44 = scmp.eq.s32.totalorder %s25, 0
      %p45 = por %p43, %p44
      %p46 = scmp.ne.s32.totalorder %s35, %s38
      %p47 = scmp.eq.s32.totalorder %s30, 1
      %p48 = por %p46, %p47
      %p49 = scmp.ne.s32.totalorder %s38, %s39
      %p50 = scmp.eq.s32.totalorder %s30, 0
      %p51 = por %p49, %p50
      %p52 = scmp.ne.s32.totalorder %s38, %s39
      %p53 = scmp.eq.s32.totalorder %s31, 1
      %p54 = por %p52, %p53
      %p56 = scmp.ne.s32.totalorder %s39, %s55
      %p57 = scmp.eq.s32.totalorder %s31, 0
      %p58 = por %p56, %p57
      %s59 = ssub.s32 %s25, %s32
      %p60 = scmp.eq.s32.totalorder %s59, 0
      %s62 = sadd.s32 %s61, 1
      %s63 = scalar_select %p60, %s61, %s62
      %p66 = pneg %p60
      %p67 = scmp.eq.s32.totalorder %s25, 1
      %p68 = por %p66, %p67
      %p69 = scmp.ne.s32.totalorder %s61, %s64
      %p70 = scmp.eq.s32.totalorder %s25, 0
      %p71 = por %p69, %p70
      %p72 = scmp.ne.s32.totalorder %s61, %s64
      %p73 = scmp.eq.s32.totalorder %s30, 1
      %p74 = por %p72, %p73
      %p75 = scmp.ne.s32.totalorder %s64, %s65
      %p76 = scmp.eq.s32.totalorder %s30, 0
      %p77 = por %p75, %p76
      %p78 = scmp.ne.s32.totalorder %s64, %s65
      %p79 = scmp.eq.s32.totalorder %s31, 1
      %p80 = por %p78, %p79
      %p82 = scmp.ne.s32.totalorder %s65, %s81
      %p83 = scmp.eq.s32.totalorder %s31, 0
      %p84 = por %p82, %p83
      %s86 = sadd.s32 %s85, 1
      %p89 = scmp.eq.s32.totalorder %s25, 1
      %p90 = scmp.ne.s32.totalorder %s85, %s87
      %p91 = scmp.eq.s32.totalorder %s25, 0
      %p92 = por %p90, %p91
      %p93 = scmp.ne.s32.totalorder %s85, %s87
      %p94 = scmp.eq.s32.totalorder %s30, 1
      %p95 = por %p93, %p94
      %p96 = scmp.ne.s32.totalorder %s87, %s88
      %p97 = scmp.eq.s32.totalorder %s30, 0
      %p98 = por %p96, %p97
      %p99 = scmp.ne.s32.totalorder %s87, %s88
      %p100 = scmp.eq.s32.totalorder %s31, 1
      %p101 = por %p99, %p100
      %p103 = scmp.ne.s32.totalorder %s88, %s102
      %p104 = scmp.eq.s32.totalorder %s31, 0
      %p105 = por %p103, %p104
      %s107 = sadd.s32 %s106, 1
      %p110 = scmp.eq.s32.totalorder %s25, 1
      %p111 = scmp.ne.s32.totalorder %s106, %s108
      %p112 = scmp.eq.s32.totalorder %s25, 0
      %p113 = por %p111, %p112
      %p114 = scmp.ne.s32.totalorder %s106, %s108
      %p115 = scmp.eq.s32.totalorder %s30, 1
      %p116 = por %p114, %p115
      %p117 = scmp.ne.s32.totalorder %s108, %s109
      %p118 = scmp.eq.s32.totalorder %s30, 0
      %p119 = por %p117, %p118
      %p120 = scmp.ne.s32.totalorder %s108, %s109
      %p121 = scmp.eq.s32.totalorder %s31, 1
      %p122 = por %p120, %p121
      %p124 = scmp.ne.s32.totalorder %s109, %s123
      %p125 = scmp.eq.s32.totalorder %s31, 0
      %p126 = por %p124, %p125
      %s128 = sadd.s32 %s127, 1
      %p131 = scmp.eq.s32.totalorder %s25, 1
      %p132 = scmp.ne.s32.totalorder %s127, %s129
      %p133 = scmp.eq.s32.totalorder %s25, 0
      %p134 = por %p132, %p133
      %p135 = scmp.ne.s32.totalorder %s127, %s129
      %p136 = scmp.eq.s32.totalorder %s30, 1
      %p137 = por %p135, %p136
      %p138 = scmp.ne.s32.totalorder %s129, %s130
      %p139 = scmp.eq.s32.totalorder %s30, 0
      %p140 = por %p138, %p139
      %p141 = scmp.ne.s32.totalorder %s129, %s130
      %p142 = scmp.eq.s32.totalorder %s31, 1
      %p143 = por %p141, %p142
      %p145 = scmp.ne.s32.totalorder %s130, %s144
      %p146 = scmp.eq.s32.totalorder %s31, 0
      %p147 = por %p145, %p146
      %s149 = sadd.s32 %s148, 1
      %p152 = scmp.eq.s32.totalorder %s25, 1
      %p153 = scmp.ne.s32.totalorder %s148, %s150
      %p154 = scmp.eq.s32.totalorder %s25, 0
      %p155 = por %p153, %p154
      %p156 = scmp.ne.s32.totalorder %s148, %s150
      %p157 = scmp.eq.s32.totalorder %s30, 1
      %p158 = por %p156, %p157
      %p159 = scmp.ne.s32.totalorder %s150, %s151
      %p160 = scmp.eq.s32.totalorder %s30, 0
      %p161 = por %p159, %p160
      %p162 = scmp.ne.s32.totalorder %s150, %s151
      %p163 = scmp.eq.s32.totalorder %s31, 1
      %p164 = por %p162, %p163
      %p166 = scmp.ne.s32.totalorder %s151, %s165
      %p167 = scmp.eq.s32.totalorder %s31, 0
      %p168 = por %p166, %p167
      %s170 = sadd.s32 %s169, 1
      %p173 = scmp.eq.s32.totalorder %s25, 1
      %p174 = scmp.ne.s32.totalorder %s169, %s171
      %p175 = scmp.eq.s32.totalorder %s25, 0
      %p176 = por %p174, %p175
      %p177 = scmp.ne.s32.totalorder %s169, %s171
      %p178 = scmp.eq.s32.totalorder %s30, 1
      %p179 = por %p177, %p178
      %p180 = scmp.ne.s32.totalorder %s171, %s172
      %p181 = scmp.eq.s32.totalorder %s30, 0
      %p182 = por %p180, %p181
      %p183 = scmp.ne.s32.totalorder %s171, %s172
      %p184 = scmp.eq.s32.totalorder %s31, 1
      %p185 = por %p183, %p184
      %p187 = scmp.ne.s32.totalorder %s172, %s186
      %p188 = scmp.eq.s32.totalorder %s31, 0
      %p189 = por %p187, %p188
      %s191 = sadd.s32 %s190, 1
      %p194 = scmp.eq.s32.totalorder %s25, 1
      %p195 = scmp.ne.s32.totalorder %s190, %s192
      %p196 = scmp.eq.s32.totalorder %s25, 0
      %p197 = por %p195, %p196
      %p198 = scmp.ne.s32.totalorder %s190, %s192
      %p199 = scmp.eq.s32.totalorder %s30, 1
      %p200 = por %p198, %p199
      %p201 = scmp.ne.s32.totalorder %s192, %s193
      %p202 = scmp.eq.s32.totalorder %s30, 0
      %p203 = por %p201, %p202
      %p204 = scmp.ne.s32.totalorder %s192, %s193
      %p205 = scmp.eq.s32.totalorder %s31, 1
      %p206 = por %p204, %p205
      %p208 = scmp.ne.s32.totalorder %s193, %s207
      %p209 = scmp.eq.s32.totalorder %s31, 0
      %p210 = por %p208, %p209
      %s212 = sadd.s32 %s211, 1
      %p215 = scmp.eq.s32.totalorder %s25, 1
      %p216 = scmp.ne.s32.totalorder %s211, %s213
      %p217 = scmp.eq.s32.totalorder %s25, 0
      %p218 = por %p216, %p217
      %p219 = scmp.ne.s32.totalorder %s211, %s213
      %p220 = scmp.eq.s32.totalorder %s30, 1
      %p221 = por %p219, %p220
      %p222 = scmp.ne.s32.totalorder %s213, %s214
      %p223 = scmp.eq.s32.totalorder %s30, 0
      %p224 = por %p222, %p223
      %p225 = scmp.ne.s32.totalorder %s213, %s214
      %p226 = scmp.eq.s32.totalorder %s31, 1
      %p227 = por %p225, %p226
      %p229 = scmp.ne.s32.totalorder %s214, %s228
      %p230 = scmp.eq.s32.totalorder %s31, 0
      %p231 = por %p229, %p230
      %s233 = sadd.s32 %s232, 1
      %p236 = scmp.eq.s32.totalorder %s25, 1
      %p237 = scmp.ne.s32.totalorder %s232, %s234
      %p238 = scmp.eq.s32.totalorder %s25, 0
      %p239 = por %p237, %p238
      %p240 = scmp.ne.s32.totalorder %s232, %s234
      %p241 = scmp.eq.s32.totalorder %s30, 1
      %p242 = por %p240, %p241
      %p243 = scmp.ne.s32.totalorder %s234, %s235
      %p244 = scmp.eq.s32.totalorder %s30, 0
      %p245 = por %p243, %p244
      %p246 = scmp.ne.s32.totalorder %s234, %s235
      %p247 = scmp.eq.s32.totalorder %s31, 1
      %p248 = por %p246, %p247
      %p250 = scmp.ne.s32.totalorder %s235, %s249
      %p251 = scmp.eq.s32.totalorder %s31, 0
      %p252 = por %p250, %p251
      %s254 = sadd.s32 %s253, 1
      %p257 = scmp.eq.s32.totalorder %s25, 1
      %p258 = scmp.ne.s32.totalorder %s253, %s255
      %p259 = scmp.eq.s32.totalorder %s25, 0
      %p260 = por %p258, %p259
      %p261 = scmp.ne.s32.totalorder %s253, %s255
      %p262 = scmp.eq.s32.totalorder %s30, 1
      %p263 = por %p261, %p262
      %p264 = scmp.ne.s32.totalorder %s255, %s256
      %p265 = scmp.eq.s32.totalorder %s30, 0
      %p266 = por %p264, %p265
      %p267 = scmp.ne.s32.totalorder %s255, %s256
      %p268 = scmp.eq.s32.totalorder %s31, 1
      %p269 = por %p267, %p268
      %p271 = scmp.ne.s32.totalorder %s256, %s270
      %p272 = scmp.eq.s32.totalorder %s31, 0
      %p273 = por %p271, %p272
      %s275 = sadd.s32 %s274, 1
      %p278 = scmp.eq.s32.totalorder %s25, 1
      %p279 = scmp.ne.s32.totalorder %s274, %s276
      %p280 = scmp.eq.s32.totalorder %s25, 0
      %p281 = por %p279, %p280
      %p282 = scmp.ne.s32.totalorder %s274, %s276
      %p283 = scmp.eq.s32.totalorder %s30, 1
      %p284 = por %p282, %p283
      %p285 = scmp.ne.s32.totalorder %s276, %s277
      %p286 = scmp.eq.s32.totalorder %s30, 0
      %p287 = por %p285, %p286
      %p288 = scmp.ne.s32.totalorder %s276, %s277
      %p289 = scmp.eq.s32.totalorder %s31, 1
      %p290 = por %p288, %p289
      %p292 = scmp.ne.s32.totalorder %s277, %s291
      %p293 = scmp.eq.s32.totalorder %s31, 0
      %p294 = por %p292, %p293
      %s296 = sadd.s32 %s295, 1
      %p299 = scmp.eq.s32.totalorder %s25, 1
      %p300 = scmp.ne.s32.totalorder %s295, %s297
      %p301 = scmp.eq.s32.totalorder %s25, 0
      %p302 = por %p300, %p301
      %p303 = scmp.ne.s32.totalorder %s295, %s297
      %p304 = scmp.eq.s32.totalorder %s30, 1
      %p305 = por %p303, %p304
      %p306 = scmp.ne.s32.totalorder %s297, %s298
      %p307 = scmp.eq.s32.totalorder %s30, 0
      %p308 = por %p306, %p307
      %p309 = scmp.ne.s32.totalorder %s297, %s298
      %p310 = scmp.eq.s32.totalorder %s31, 1
      %p311 = por %p309, %p310
      %p313 = scmp.ne.s32.totalorder %s298, %s312
      %p314 = scmp.eq.s32.totalorder %s31, 0
      %p315 = por %p313, %p314
      %s317 = sadd.s32 %s316, 1
      %p320 = scmp.eq.s32.totalorder %s25, 1
      %p321 = scmp.ne.s32.totalorder %s316, %s318
      %p322 = scmp.eq.s32.totalorder %s25, 0
      %p323 = por %p321, %p322
      %p324 = scmp.ne.s32.totalorder %s316, %s318
      %p325 = scmp.eq.s32.totalorder %s30, 1
      %p326 = por %p324, %p325
      %p327 = scmp.ne.s32.totalorder %s318, %s319
      %p328 = scmp.eq.s32.totalorder %s30, 0
      %p329 = por %p327, %p328
      %p330 = scmp.ne.s32.totalorder %s318, %s319
      %p331 = scmp.eq.s32.totalorder %s31, 1
      %p332 = por %p330, %p331
      %p334 = scmp.ne.s32.totalorder %s319, %s333
      %p335 = scmp.eq.s32.totalorder %s31, 0
      %p336 = por %p334, %p335
      %s338 = sadd.s32 %s337, 1
      %p341 = scmp.eq.s32.totalorder %s25, 1
      %p342 = scmp.ne.s32.totalorder %s337, %s339
      %p343 = scmp.eq.s32.totalorder %s25, 0
      %p344 = por %p342, %p343
      %p345 = scmp.ne.s32.totalorder %s337, %s339
      %p346 = scmp.eq.s32.totalorder %s30, 1
      %p347 = por %p345, %p346
      %p348 = scmp.ne.s32.totalorder %s339, %s340
      %p349 = scmp.eq.s32.totalorder %s30, 0
      %p350 = por %p348, %p349
      %p351 = scmp.ne.s32.totalorder %s339, %s340
      %p352 = scmp.eq.s32.totalorder %s31, 1
      %p353 = por %p351, %p352
      %p355 = scmp.ne.s32.totalorder %s340, %s354
      %p356 = scmp.eq.s32.totalorder %s31, 0
      %p357 = por %p355, %p356
      %s359 = sadd.s32 %s358, 1
      %p362 = scmp.eq.s32.totalorder %s25, 1
      %p363 = scmp.ne.s32.totalorder %s358, %s360
      %p364 = scmp.eq.s32.totalorder %s25, 0
      %p365 = por %p363, %p364
      %p366 = scmp.ne.s32.totalorder %s358, %s360
      %p367 = scmp.eq.s32.totalorder %s30, 1
      %p368 = por %p366, %p367
      %p369 = scmp.ne.s32.totalorder %s360, %s361
      %p370 = scmp.eq.s32.totalorder %s30, 0
      %p371 = por %p369, %p370
      %p372 = scmp.ne.s32.totalorder %s360, %s361
      %p373 = scmp.eq.s32.totalorder %s31, 1
      %p374 = por %p372, %p373
      %p376 = scmp.ne.s32.totalorder %s361, %s375
      %p377 = scmp.eq.s32.totalorder %s31, 0
      %p378 = por %p376, %p377
      %s379 = ssub.s32 %s25, %s32
      %p380 = scmp.eq.s32.totalorder %s379, 0
      %s382 = sadd.s32 %s381, 1
      %s383 = scalar_select %p380, %s381, %s382
      %p386 = pneg %p380
      %p387 = scmp.eq.s32.totalorder %s25, 1
      %p388 = por %p386, %p387
      %p389 = scmp.ne.s32.totalorder %s381, %s384
      %p390 = scmp.eq.s32.totalorder %s25, 0
      %p391 = por %p389, %p390
      %p392 = scmp.ne.s32.totalorder %s381, %s384
      %p393 = scmp.eq.s32.totalorder %s30, 1
      %p394 = por %p392, %p393
      %p395 = scmp.ne.s32.totalorder %s384, %s385
      %p396 = scmp.eq.s32.totalorder %s30, 0
      %p397 = por %p395, %p396
      %p398 = scmp.ne.s32.totalorder %s384, %s385
      %p399 = scmp.eq.s32.totalorder %s31, 1
      %p400 = por %p398, %p399
      %p402 = scmp.ne.s32.totalorder %s385, %s401
      %p403 = scmp.eq.s32.totalorder %s31, 0
      %p404 = por %p402, %p403
      %p405 = scmp.le.s32.totalorder 1, %s25
      %p406 = scmp.lt.s32.totalorder %s25, 3
      %p407 = pnand %p405, %p406
      %p408 = pneg %p407
      // Predicated region
      $region9: #{bert_forward.1} parent=5 // pred_check
        _
      $region10: #{bert_forward.1} parent=5 // pred_check_branch
        %410 = sbr.rel (%p407) target = $region12
      $region11: #{bert_forward.1} parent=5 // pred_region
        %s411 = ssub.s32 %s25, 1
        // Predicated region
        $region13: #{bert_forward.1} parent=11 // pred_check
          %p412 = pneg %p98
        $region14: #{bert_forward.1} parent=11 // pred_check_branch
          %414 = sbr.rel (%p412) target = $region16
        $region15: #{bert_forward.1} parent=11 // pred_region
          _
        $region16: #{bert_forward.1} parent=11 // pred_fallthru
          _
        // Predicated region
        $region17: #{bert_forward.1} parent=11 // pred_check
          %p415 = pneg %p119
        $region18: #{bert_forward.1} parent=11 // pred_check_branch
          %417 = sbr.rel (%p415) target = $region20
        $region19: #{bert_forward.1} parent=11 // pred_region
          _
        $region20: #{bert_forward.1} parent=11 // pred_fallthru
          _
        // Predicated region
        $region21: #{bert_forward.1} parent=11 // pred_check
          %p418 = pneg %p140
        $region22: #{bert_forward.1} parent=11 // pred_check_branch
          %420 = sbr.rel (%p418) target = $region24
        $region23: #{bert_forward.1} parent=11 // pred_region
          _
        $region24: #{bert_forward.1} parent=11 // pred_fallthru
          _
        // Predicated region
        $region25: #{bert_forward.1} parent=11 // pred_check
          %p421 = pneg %p161
        $region26: #{bert_forward.1} parent=11 // pred_check_branch
          %423 = sbr.rel (%p421) target = $region28
        $region27: #{bert_forward.1} parent=11 // pred_region
          _
        $region28: #{bert_forward.1} parent=11 // pred_fallthru
          _
        // Predicated region
        $region29: #{bert_forward.1} parent=11 // pred_check
          %p424 = pneg %p182
        $region30: #{bert_forward.1} parent=11 // pred_check_branch
          %426 = sbr.rel (%p424) target = $region32
        $region31: #{bert_forward.1} parent=11 // pred_region
          _
        $region32: #{bert_forward.1} parent=11 // pred_fallthru
          _
        // Predicated region
        $region33: #{bert_forward.1} parent=11 // pred_check
          %p427 = pneg %p203
        $region34: #{bert_forward.1} parent=11 // pred_check_branch
          %429 = sbr.rel (%p427) target = $region36
        $region35: #{bert_forward.1} parent=11 // pred_region
          _
        $region36: #{bert_forward.1} parent=11 // pred_fallthru
          _
        // Predicated region
        $region37: #{bert_forward.1} parent=11 // pred_check
          %p430 = pneg %p224
        $region38: #{bert_forward.1} parent=11 // pred_check_branch
          %432 = sbr.rel (%p430) target = $region40
        $region39: #{bert_forward.1} parent=11 // pred_region
          _
        $region40: #{bert_forward.1} parent=11 // pred_fallthru
          _
        // Predicated region
        $region41: #{bert_forward.1} parent=11 // pred_check
          %p433 = pneg %p245
        $region42: #{bert_forward.1} parent=11 // pred_check_branch
          %435 = sbr.rel (%p433) target = $region44
        $region43: #{bert_forward.1} parent=11 // pred_region
          _
        $region44: #{bert_forward.1} parent=11 // pred_fallthru
          _
        // Predicated region
        $region45: #{bert_forward.1} parent=11 // pred_check
          %p436 = pneg %p266
        $region46: #{bert_forward.1} parent=11 // pred_check_branch
          %438 = sbr.rel (%p436) target = $region48
        $region47: #{bert_forward.1} parent=11 // pred_region
          _
        $region48: #{bert_forward.1} parent=11 // pred_fallthru
          _
        // Predicated region
        $region49: #{bert_forward.1} parent=11 // pred_check
          %p439 = pneg %p287
        $region50: #{bert_forward.1} parent=11 // pred_check_branch
          %441 = sbr.rel (%p439) target = $region52
        $region51: #{bert_forward.1} parent=11 // pred_region
          _
        $region52: #{bert_forward.1} parent=11 // pred_fallthru
          _
        // Predicated region
        $region53: #{bert_forward.1} parent=11 // pred_check
          %p442 = pneg %p308
        $region54: #{bert_forward.1} parent=11 // pred_check_branch
          %444 = sbr.rel (%p442) target = $region56
        $region55: #{bert_forward.1} parent=11 // pred_region
          _
        $region56: #{bert_forward.1} parent=11 // pred_fallthru
          _
        // Predicated region
        $region57: #{bert_forward.1} parent=11 // pred_check
          %p445 = pneg %p329
        $region58: #{bert_forward.1} parent=11 // pred_check_branch
          %447 = sbr.rel (%p445) target = $region60
        $region59: #{bert_forward.1} parent=11 // pred_region
          _
        $region60: #{bert_forward.1} parent=11 // pred_fallthru
          _
        // Predicated region
        $region61: #{bert_forward.1} parent=11 // pred_check
          %p448 = pneg %p350
        $region62: #{bert_forward.1} parent=11 // pred_check_branch
          %450 = sbr.rel (%p448) target = $region64
        $region63: #{bert_forward.1} parent=11 // pred_region
          _
        $region64: #{bert_forward.1} parent=11 // pred_fallthru
          _
        // Predicated region
        $region65: #{bert_forward.1} parent=11 // pred_check
          %p451 = pneg %p371
        $region66: #{bert_forward.1} parent=11 // pred_check_branch
          %453 = sbr.rel (%p451) target = $region68
        $region67: #{bert_forward.1} parent=11 // pred_region
          _
        $region68: #{bert_forward.1} parent=11 // pred_fallthru
          _
      $region12: #{bert_forward.1} parent=5 // pred_fallthru
        _
      %p454 = scmp.lt.s32.totalorder %s25, 2
      // Predicated region
      $region69: #{bert_forward.1} parent=5 // pred_check
        %p455 = pneg %p454
      $region70: #{bert_forward.1} parent=5 // pred_check_branch
        %457 = sbr.rel (%p455) target = $region72
      $region71: #{bert_forward.1} parent=5 // pred_region
        // Predicated region
        $region73: #{bert_forward.1} parent=71 // pred_check
          %p458 = pneg %p45
        $region74: #{bert_forward.1} parent=71 // pred_check_branch
          %460 = sbr.rel (%p458) target = $region76
        $region75: #{bert_forward.1} parent=71 // pred_region
          %p461 = scmp.lt.s32.totalorder %s25, 1
          %s462 = scalar_select %p461, %s25, 1
          %s463 = smul.addr %s462, 8
          %s464 = scalar_lea.vmem %s0, %s463
        $region76: #{bert_forward.1} parent=71 // pred_fallthru
          _
        // Predicated region
        $region77: #{bert_forward.1} parent=71 // pred_check
          %p465 = pneg %p71
        $region78: #{bert_forward.1} parent=71 // pred_check_branch
          %467 = sbr.rel (%p465) target = $region80
        $region79: #{bert_forward.1} parent=71 // pred_region
          %p468 = scmp.lt.s32.totalorder %s25, 1
          %s469 = scalar_select %p468, %s25, 1
          %s470 = scalar_lea.vmem %s1, %s469
        $region80: #{bert_forward.1} parent=71 // pred_fallthru
          _
      $region72: #{bert_forward.1} parent=5 // pred_fallthru
        _
      %p471 = scmp.le.s32.totalorder 1, %s25
      %p472 = scmp.lt.s32.totalorder %s25, 3
      %p473 = pnand %p471, %p472
      %p474 = pneg %p473
      // Predicated region
      $region81: #{bert_forward.1} parent=5 // pred_check
        _
      $region82: #{bert_forward.1} parent=5 // pred_check_branch
        %476 = sbr.rel (%p473) target = $region84
      $region83: #{bert_forward.1} parent=5 // pred_region
        %s477 = ssub.s32 %s25, 1
        %p478 = scmp.lt.s32.totalorder %s30, 1
        %s479 = scalar_select %p478, %s30, 1
        %s480 = smul.addr %s479, 8
        %s481 = scalar_lea.vmem %s0, %s480
        %p482 = pneg %p51
        %p483 = pneg %p48
        %p484 = scmp.lt.s32.totalorder %s30, 1
        %s485 = scalar_select %p484, %s30, 1
        %s486 = scalar_lea.vmem %s1, %s485
        %p487 = pneg %p77
        %p488 = pneg %p74
        %p489 = pneg %p98
        %p490 = pneg %p95
        %p491 = pneg %p119
        %p492 = pneg %p116
        %p493 = pneg %p140
        %p494 = pneg %p137
        %p495 = pneg %p161
        %p496 = pneg %p158
        %p497 = pneg %p182
        %p498 = pneg %p179
        %p499 = pneg %p203
        %p500 = pneg %p200
        %p501 = pneg %p224
        %p502 = pneg %p221
        %p503 = pneg %p245
        %p504 = pneg %p242
        %p505 = pneg %p266
        %p506 = pneg %p263
        %p507 = pneg %p287
        %p508 = pneg %p284
        %p509 = pneg %p308
        %p510 = pneg %p305
        %p511 = pneg %p329
        %p512 = pneg %p326
        %p513 = pneg %p350
        %p514 = pneg %p347
        %p515 = pneg %p371
        %p516 = pneg %p368
        %p517 = pneg %p397
        %p518 = pneg %p394
        %s519 = sand.u32 %s384, 1
        %s520 = scalar_lea.sflag [#allocation3], %s519
        %s521 = sand.u32 %s384, 1
        %s522 = smul.addr %s521, 8
        %s523 = scalar_lea.vmem [#allocation2], %s522
        %p524 = scmp.lt.s32.totalorder %s30, 1
        %s525 = scalar_select %p524, %s30, 1
        %s526 = smul.addr %s525, 8
        %s527 = scalar_lea.vmem %s0, %s526
        %p528 = scmp.lt.s32.totalorder %s30, 1
        %s529 = scalar_select %p528, %s30, 1
        %s530 = scalar_lea.vmem %s1, %s529
        %v532 = vld [vmem:[%s527] sm:$0xff]
        %v533 = vld [vmem:[%s2] sm:$0x1]
        %v534 = vld [vmem:[%s3] sm:$0x1]
        %vm535 = vcmask 261120
        %v536 = vsel %vm535, %v532, 0.0
        %537 = vadd.xlane.f32.xlu0 %v536
        %v538 = vpop.xlane.xlu0 %537
        %v539 = vrcp.pop 32.0
        %v540 = vmul.f32 %v538, %v539
        %v541 = vsub.f32 %v532, %v540
        %v542 = vmul.f32 %v541, %v541
        %v543 = vsel %vm535, %v542, 0.0
        %544 = vadd.xlane.f32.xlu0 %v543
        %v545 = vpop.xlane.xlu0 %544
        %v546 = vmul.f32 %v545, %v539
        %v547 = vadd.f32 %v546, 1e-12
        %v548 = vrsqrt.pop %v547
        %v549 = vmul.f32 %v541, %v548
        %v551 = vlaneseq
        %v552 = vshrl.u32 %v551, 7
        %v553 = vsub.s32 0, %v552
        %v554 = vrot.slane %v533, %v553
        %v556 = vmul.f32 %v549, %v554
        %v558 = vlaneseq
        %v559 = vshrl.u32 %v558, 7
        %v560 = vsub.s32 0, %v559
        %v561 = vrot.slane %v534, %v560
        %v563 = vadd.f32 %v556, %v561
        %v564 = vld [vmem:[%s530] sm:$0x1]
        %v565 = vpack.c.bf16 %v563, %v563
        %v566 = vld [vmem:[%s4] sm:$0xf]
        %v567 = vld [vmem:[%s4 + $0x4] sm:$0xf]
        %v568 = vld [vmem:[%s4 + $0x8] sm:$0xf]
        %v569 = vld [vmem:[%s4 + $0xc] sm:$0xf]
        %v570 = vld [vmem:[%s5] sm:$0x1]
        %v572 = vlaneseq
        %v573 = vshrl.u32 %v572, 7
        %v574 = vsub.s32 0, %v573
        %v575 = vrot.slane %v570, %v574
        %v581 = vunpack.c.l.b16 %v566
        %v582 = vunpack.c.l.b16 %v567
        %v583 = vunpack.c.l.b16 %v568
        %v584 = vunpack.c.l.b16 %v569
        %v585 = vpack.c.b16 %v582, %v581
        %v586 = vpack.c.b16 %v584, %v583
        %v590 = vsel %vm535, %v565, 0
        %592 = vmatprep.subr.bf16.mxu0 0
        %593 = vmatpush1.bf16.msra.mxu0 0
        %594 = vmatprep.subr.bf16.mxu0 0
        %595 = vmatpush1.bf16.msra.mxu0 0
        %596 = vmatprep.subr.bf16.mxu0 0
        %597 = vmatpush1.bf16.msra.mxu0 0
        %598 = vmatprep.subr.bf16.mxu0 0
        %599 = vmatpush1.bf16.msra.mxu0 0
        %600 = vmatprep.subr.bf16.mxu0 0
        %601 = vmatpush1.bf16.msra.mxu0 0
        %602 = vmatprep.subr.bf16.mxu0 0
        %603 = vmatpush1.bf16.msra.mxu0 0
        %604 = vmatprep.subr.bf16.mxu0 0
        %605 = vmatpush1.bf16.msra.mxu0 %v586
        %606 = vmatprep.subr.bf16.mxu0 0
        %607 = vmatpush1.bf16.msra.mxu0 %v585
        %608 = vmatprep.subr.bf16.mxu0 0
        %609 = vmatpush2.bf16.msra.mxu0 0
        %610 = vmatprep.subr.bf16.mxu0 0
        %611 = vmatpush2.bf16.msra.mxu0 0
        %612 = vmatprep.subr.bf16.mxu0 0
        %613 = vmatpush2.bf16.msra.mxu0 0
        %614 = vmatprep.subr.bf16.mxu0 0
        %615 = vmatpush2.bf16.msra.mxu0 0
        %616 = vmatprep.subr.bf16.mxu0 0
        %617 = vmatpush2.bf16.msra.mxu0 0
        %618 = vmatprep.subr.bf16.mxu0 0
        %619 = vmatpush2.bf16.msra.mxu0 0
        %620 = vmatprep.subr.bf16.mxu0 0
        %621 = vmatpush2.bf16.msra.mxu0 0
        %622 = vmatprep.subr.bf16.mxu0 0
        %623 = vmatpush2.bf16.msra.mxu0 0
        %624 = vmatprep.mubr.bf16.mxu0 0
        %625 = vmatmul.mubr.bf16.gmra.mxu0 %v590
        %v626 = vpop.f32.mrf.mxu0
        %v627 = vadd.f32 %v575, %v626
        %v628 = vpop.f32.mrf.mxu0
        %v629 = vpop.f32.mrf.mxu0
        %v630 = vpop.f32.mrf.mxu0
        %631 = vdwg.mxu0
        %633 = vrot.lane.b32.xlu0 %v627, 120
        %v634 = vpop.permute.xlu0 %633
        %636 = vrot.lane.b32.xlu0 %v627, 112
        %v637 = vpop.permute.xlu0 %636
        %639 = vrot.lane.b32.xlu0 %v627, 104
        %v640 = vpop.permute.xlu0 %639
        %v642 = vpack.c.bf16 %v627, %v627
        %v643 = vpack.c.bf16 %v634, %v634
        %v644 = vpack.c.bf16 %v637, %v637
        %v645 = vpack.c.bf16 %v640, %v640
        %v647 = vlaneseq
        %v648 = vshrl.u32 %v647, 7
        %v649 = vsub.s32 0, %v648
        %v650 = vrot.slane %v564, %v649
        %653 = vrot.lane.b32.xlu0 %v642, 96
        %v654 = vpop.permute.xlu0 %653
        %vm655 = vcmask 64512
        %v657 = vsel %vm655, %v642, 0
        %v660 = vsel %vm655, %v654, 0
        %662 = vmatprep.subr.bf16.mxu0 0
        %663 = vmatpush1.bf16.xpose.msra.mxu0 0
        %664 = vmatprep.subr.bf16.mxu0 0
        %665 = vmatpush1.bf16.xpose.msra.mxu0 0
        %666 = vmatprep.subr.bf16.mxu0 0
        %667 = vmatpush1.bf16.xpose.msra.mxu0 0
        %668 = vmatprep.subr.bf16.mxu0 0
        %669 = vmatpush1.bf16.xpose.msra.mxu0 0
        %670 = vmatprep.subr.bf16.mxu0 0
        %671 = vmatpush1.bf16.xpose.msra.mxu0 0
        %672 = vmatprep.subr.bf16.mxu0 0
        %673 = vmatpush1.bf16.xpose.msra.mxu0 0
        %674 = vmatprep.subr.bf16.mxu0 0
        %675 = vmatpush1.bf16.xpose.msra.mxu0 0
        %676 = vmatprep.subr.bf16.mxu0 0
        %677 = vmatpush1.bf16.xpose.msra.mxu0 %v660
        %678 = vmatprep.subr.bf16.mxu0 0
        %679 = vmatpush2.bf16.xpose.msra.mxu0 0
        %680 = vmatprep.subr.bf16.mxu0 0
        %681 = vmatpush2.bf16.xpose.msra.mxu0 0
        %682 = vmatprep.subr.bf16.mxu0 0
        %683 = vmatpush2.bf16.xpose.msra.mxu0 0
        %684 = vmatprep.subr.bf16.mxu0 0
        %685 = vmatpush2.bf16.xpose.msra.mxu0 0
        %686 = vmatprep.subr.bf16.mxu0 0
        %687 = vmatpush2.bf16.xpose.msra.mxu0 0
        %688 = vmatprep.subr.bf16.mxu0 0
        %689 = vmatpush2.bf16.xpose.msra.mxu0 0
        %690 = vmatprep.subr.bf16.mxu0 0
        %691 = vmatpush2.bf16.xpose.msra.mxu0 0
        %692 = vmatprep.subr.bf16.mxu0 0
        %693 = vmatpush2.bf16.xpose.msra.mxu0 0
        %694 = vmatprep.mubr.bf16.mxu0 0
        %695 = vmatmul.mubr.bf16.gmra.mxu0 %v657
        %v696 = vpop.f32.mrf.mxu0
        %v697 = vadd.f32 %v650, %v696
        %v698 = vpop.f32.mrf.mxu0
        %v699 = vpop.f32.mrf.mxu0
        %v700 = vpop.f32.mrf.mxu0
        %701 = vdwg.mxu0
        %703 = vrot.lane.b32.xlu0 %v643, 96
        %v704 = vpop.permute.xlu0 %703
        %v706 = vsel %vm655, %v643, 0
        %v709 = vsel %vm655, %v704, 0
        %711 = vmatprep.subr.bf16.mxu0 0
        %712 = vmatpush1.bf16.xpose.msra.mxu0 0
        %713 = vmatprep.subr.bf16.mxu0 0
        %714 = vmatpush1.bf16.xpose.msra.mxu0 0
        %715 = vmatprep.subr.bf16.mxu0 0
        %716 = vmatpush1.bf16.xpose.msra.mxu0 0
        %717 = vmatprep.subr.bf16.mxu0 0
        %718 = vmatpush1.bf16.xpose.msra.mxu0 0
        %719 = vmatprep.subr.bf16.mxu0 0
        %720 = vmatpush1.bf16.xpose.msra.mxu0 0
        %721 = vmatprep.subr.bf16.mxu0 0
        %722 = vmatpush1.bf16.xpose.msra.mxu0 0
        %723 = vmatprep.subr.bf16.mxu0 0
        %724 = vmatpush1.bf16.xpose.msra.mxu0 0
        %725 = vmatprep.subr.bf16.mxu0 0
        %726 = vmatpush1.bf16.xpose.msra.mxu0 %v709
        %727 = vmatprep.subr.bf16.mxu0 0
        %728 = vmatpush2.bf16.xpose.msra.mxu0 0
        %729 = vmatprep.subr.bf16.mxu0 0
        %730 = vmatpush2.bf16.xpose.msra.mxu0 0
        %731 = vmatprep.subr.bf16.mxu0 0
        %732 = vmatpush2.bf16.xpose.msra.mxu0 0
        %733 = vmatprep.subr.bf16.mxu0 0
        %734 = vmatpush2.bf16.xpose.msra.mxu0 0
        %735 = vmatprep.subr.bf16.mxu0 0
        %736 = vmatpush2.bf16.xpose.msra.mxu0 0
        %737 = vmatprep.subr.bf16.mxu0 0
        %738 = vmatpush2.bf16.xpose.msra.mxu0 0
        %739 = vmatprep.subr.bf16.mxu0 0
        %740 = vmatpush2.bf16.xpose.msra.mxu0 0
        %741 = vmatprep.subr.bf16.mxu0 0
        %742 = vmatpush2.bf16.xpose.msra.mxu0 0
        %743 = vmatprep.mubr.bf16.mxu0 0
        %744 = vmatmul.mubr.bf16.gmra.mxu0 %v706
        %v745 = vpop.f32.mrf.mxu0
        %v746 = vadd.f32 %v650, %v745
        %v747 = vpop.f32.mrf.mxu0
        %v748 = vpop.f32.mrf.mxu0
        %v749 = vpop.f32.mrf.mxu0
        %750 = vdwg.mxu0
        %752 = vrot.lane.b32.xlu0 %v644, 96
        %v753 = vpop.permute.xlu0 %752
        %v755 = vsel %vm655, %v644, 0
        %v758 = vsel %vm655, %v753, 0
        %760 = vmatprep.subr.bf16.mxu0 0
        %761 = vmatpush1.bf16.xpose.msra.mxu0 0
        %762 = vmatprep.subr.bf16.mxu0 0
        %763 = vmatpush1.bf16.xpose.msra.mxu0 0
        %764 = vmatprep.subr.bf16.mxu0 0
        %765 = vmatpush1.bf16.xpose.msra.mxu0 0
        %766 = vmatprep.subr.bf16.mxu0 0
        %767 = vmatpush1.bf16.xpose.msra.mxu0 0
        %768 = vmatprep.subr.bf16.mxu0 0
        %769 = vmatpush1.bf16.xpose.msra.mxu0 0
        %770 = vmatprep.subr.bf16.mxu0 0
        %771 = vmatpush1.bf16.xpose.msra.mxu0 0
        %772 = vmatprep.subr.bf16.mxu0 0
        %773 = vmatpush1.bf16.xpose.msra.mxu0 0
        %774 = vmatprep.subr.bf16.mxu0 0
        %775 = vmatpush1.bf16.xpose.msra.mxu0 %v758
        %776 = vmatprep.subr.bf16.mxu0 0
        %777 = vmatpush2.bf16.xpose.msra.mxu0 0
        %778 = vmatprep.subr.bf16.mxu0 0
        %779 = vmatpush2.bf16.xpose.msra.mxu0 0
        %780 = vmatprep.subr.bf16.mxu0 0
        %781 = vmatpush2.bf16.xpose.msra.mxu0 0
        %782 = vmatprep.subr.bf16.mxu0 0
        %783 = vmatpush2.bf16.xpose.msra.mxu0 0
        %784 = vmatprep.subr.bf16.mxu0 0
        %785 = vmatpush2.bf16.xpose.msra.mxu0 0
        %786 = vmatprep.subr.bf16.mxu0 0
        %787 = vmatpush2.bf16.xpose.msra.mxu0 0
        %788 = vmatprep.subr.bf16.mxu0 0
        %789 = vmatpush2.bf16.xpose.msra.mxu0 0
        %790 = vmatprep.subr.bf16.mxu0 0
        %791 = vmatpush2.bf16.xpose.msra.mxu0 0
        %792 = vmatprep.mubr.bf16.mxu0 0
        %793 = vmatmul.mubr.bf16.gmra.mxu0 %v755
        %v794 = vpop.f32.mrf.mxu0
        %v795 = vadd.f32 %v650, %v794
        %v796 = vpop.f32.mrf.mxu0
        %v797 = vpop.f32.mrf.mxu0
        %v798 = vpop.f32.mrf.mxu0
        %799 = vdwg.mxu0
        %801 = vrot.lane.b32.xlu0 %v645, 96
        %v802 = vpop.permute.xlu0 %801
        %v804 = vsel %vm655, %v645, 0
        %v807 = vsel %vm655, %v802, 0
        %809 = vmatprep.subr.bf16.mxu0 0
        %810 = vmatpush1.bf16.xpose.msra.mxu0 0
        %811 = vmatprep.subr.bf16.mxu0 0
        %812 = vmatpush1.bf16.xpose.msra.mxu0 0
        %813 = vmatprep.subr.bf16.mxu0 0
        %814 = vmatpush1.bf16.xpose.msra.mxu0 0
        %815 = vmatprep.subr.bf16.mxu0 0
        %816 = vmatpush1.bf16.xpose.msra.mxu0 0
        %817 = vmatprep.subr.bf16.mxu0 0
        %818 = vmatpush1.bf16.xpose.msra.mxu0 0
        %819 = vmatprep.subr.bf16.mxu0 0
        %820 = vmatpush1.bf16.xpose.msra.mxu0 0
        %821 = vmatprep.subr.bf16.mxu0 0
        %822 = vmatpush1.bf16.xpose.msra.mxu0 0
        %823 = vmatprep.subr.bf16.mxu0 0
        %824 = vmatpush1.bf16.xpose.msra.mxu0 %v807
        %825 = vmatprep.subr.bf16.mxu0 0
        %826 = vmatpush2.bf16.xpose.msra.mxu0 0
        %827 = vmatprep.subr.bf16.mxu0 0
        %828 = vmatpush2.bf16.xpose.msra.mxu0 0
        %829 = vmatprep.subr.bf16.mxu0 0
        %830 = vmatpush2.bf16.xpose.msra.mxu0 0
        %831 = vmatprep.subr.bf16.mxu0 0
        %832 = vmatpush2.bf16.xpose.msra.mxu0 0
        %833 = vmatprep.subr.bf16.mxu0 0
        %834 = vmatpush2.bf16.xpose.msra.mxu0 0
        %835 = vmatprep.subr.bf16.mxu0 0
        %836 = vmatpush2.bf16.xpose.msra.mxu0 0
        %837 = vmatprep.subr.bf16.mxu0 0
        %838 = vmatpush2.bf16.xpose.msra.mxu0 0
        %839 = vmatprep.subr.bf16.mxu0 0
        %840 = vmatpush2.bf16.xpose.msra.mxu0 0
        %841 = vmatprep.mubr.bf16.mxu0 0
        %842 = vmatmul.mubr.bf16.gmra.mxu0 %v804
        %v843 = vpop.f32.mrf.mxu0
        %v844 = vadd.f32 %v650, %v843
        %v845 = vpop.f32.mrf.mxu0
        %v846 = vpop.f32.mrf.mxu0
        %v847 = vpop.f32.mrf.mxu0
        %848 = vdwg.mxu0
        %v849 = vsel %vm655, %v697, -inf
        %850 = vmax.xlane.f32.xlu0 %v849
        %v851 = vpop.xlane.xlu0 %850
        %v852 = vsel %vm655, %v746, -inf
        %853 = vmax.xlane.f32.xlu0 %v852
        %v854 = vpop.xlane.xlu0 %853
        %v855 = vsel %vm655, %v795, -inf
        %856 = vmax.xlane.f32.xlu0 %v855
        %v857 = vpop.xlane.xlu0 %856
        %v858 = vsel %vm655, %v844, -inf
        %859 = vmax.xlane.f32.xlu0 %v858
        %v860 = vpop.xlane.xlu0 %859
        %v861 = vsub.f32 %v697, %v851
        %v862 = vsub.f32 %v746, %v854
        %v863 = vsub.f32 %v795, %v857
        %v864 = vsub.f32 %v844, %v860
        %v865 = vmul.f32 %v861, 1.442695
        %v866 = vpow.pop %v865
        %v867 = vmul.f32 %v862, 1.442695
        %v868 = vpow.pop %v867
        %v869 = vmul.f32 %v863, 1.442695
        %v870 = vpow.pop %v869
        %v871 = vmul.f32 %v864, 1.442695
        %v872 = vpow.pop %v871
        %v873 = vsel %vm655, %v866, 0.0
        %874 = vadd.xlane.f32.xlu0 %v873
        %v875 = vpop.xlane.xlu0 %874
        %v876 = vsel %vm655, %v868, 0.0
        %877 = vadd.xlane.f32.xlu0 %v876
        %v878 = vpop.xlane.xlu0 %877
        %v879 = vsel %vm655, %v870, 0.0
        %880 = vadd.xlane.f32.xlu0 %v879
        %v881 = vpop.xlane.xlu0 %880
        %v882 = vsel %vm655, %v872, 0.0
        %883 = vadd.xlane.f32.xlu0 %v882
        %v884 = vpop.xlane.xlu0 %883
        %v885 = vrcp.pop %v875
        %v886 = vrcp.pop %v878
        %v887 = vrcp.pop %v881
        %v888 = vrcp.pop %v884
        %v889 = vmul.f32 %v866, %v885
        %v890 = vmul.f32 %v868, %v886
        %v891 = vmul.f32 %v870, %v887
        %v892 = vmul.f32 %v872, %v888
        %v893 = vpack.c.bf16 %v889, %v889
        %v894 = vpack.c.bf16 %v890, %v890
        %v895 = vpack.c.bf16 %v891, %v891
        %v896 = vpack.c.bf16 %v892, %v892
        %897 = vrot.lane.b32.xlu0 %v642, 64
        %v898 = vpop.permute.xlu0 %897
        %v900 = vsel %vm655, %v893, 0
        %vm902 = vcmask 1043456
        %v904 = vsel %vm902, %v898, 0
        %906 = vmatprep.subr.bf16.mxu0 0
        %907 = vmatpush1.bf16.msra.mxu0 0
        %908 = vmatprep.subr.bf16.mxu0 0
        %909 = vmatpush1.bf16.msra.mxu0 0
        %910 = vmatprep.subr.bf16.mxu0 0
        %911 = vmatpush1.bf16.msra.mxu0 0
        %912 = vmatprep.subr.bf16.mxu0 0
        %913 = vmatpush1.bf16.msra.mxu0 0
        %914 = vmatprep.subr.bf16.mxu0 0
        %915 = vmatpush1.bf16.msra.mxu0 0
        %916 = vmatprep.subr.bf16.mxu0 0
        %917 = vmatpush1.bf16.msra.mxu0 0
        %918 = vmatprep.subr.bf16.mxu0 0
        %919 = vmatpush1.bf16.msra.mxu0 0
        %920 = vmatprep.subr.bf16.mxu0 0
        %921 = vmatpush1.bf16.msra.mxu0 %v904
        %922 = vmatprep.subr.bf16.mxu0 0
        %923 = vmatpush2.bf16.msra.mxu0 0
        %924 = vmatprep.subr.bf16.mxu0 0
        %925 = vmatpush2.bf16.msra.mxu0 0
        %926 = vmatprep.subr.bf16.mxu0 0
        %927 = vmatpush2.bf16.msra.mxu0 0
        %928 = vmatprep.subr.bf16.mxu0 0
        %929 = vmatpush2.bf16.msra.mxu0 0
        %930 = vmatprep.subr.bf16.mxu0 0
        %931 = vmatpush2.bf16.msra.mxu0 0
        %932 = vmatprep.subr.bf16.mxu0 0
        %933 = vmatpush2.bf16.msra.mxu0 0
        %934 = vmatprep.subr.bf16.mxu0 0
        %935 = vmatpush2.bf16.msra.mxu0 0
        %936 = vmatprep.subr.bf16.mxu0 0
        %937 = vmatpush2.bf16.msra.mxu0 0
        %938 = vmatprep.mubr.bf16.mxu0 0
        %939 = vmatmul.mubr.bf16.gmra.mxu0 %v900
        %v940 = vpop.f32.mrf.mxu0
        %v941 = vadd.f32 0.0, %v940
        %v942 = vpop.f32.mrf.mxu0
        %v943 = vpop.f32.mrf.mxu0
        %v944 = vpop.f32.mrf.mxu0
        %945 = vdwg.mxu0
        %946 = vrot.lane.b32.xlu0 %v643, 64
        %v947 = vpop.permute.xlu0 %946
        %v949 = vsel %vm655, %v894, 0
        %v952 = vsel %vm902, %v947, 0
        %954 = vmatprep.subr.bf16.mxu0 0
        %955 = vmatpush1.bf16.msra.mxu0 0
        %956 = vmatprep.subr.bf16.mxu0 0
        %957 = vmatpush1.bf16.msra.mxu0 0
        %958 = vmatprep.subr.bf16.mxu0 0
        %959 = vmatpush1.bf16.msra.mxu0 0
        %960 = vmatprep.subr.bf16.mxu0 0
        %961 = vmatpush1.bf16.msra.mxu0 0
        %962 = vmatprep.subr.bf16.mxu0 0
        %963 = vmatpush1.bf16.msra.mxu0 0
        %964 = vmatprep.subr.bf16.mxu0 0
        %965 = vmatpush1.bf16.msra.mxu0 0
        %966 = vmatprep.subr.bf16.mxu0 0
        %967 = vmatpush1.bf16.msra.mxu0 0
        %968 = vmatprep.subr.bf16.mxu0 0
        %969 = vmatpush1.bf16.msra.mxu0 %v952
        %970 = vmatprep.subr.bf16.mxu0 0
        %971 = vmatpush2.bf16.msra.mxu0 0
        %972 = vmatprep.subr.bf16.mxu0 0
        %973 = vmatpush2.bf16.msra.mxu0 0
        %974 = vmatprep.subr.bf16.mxu0 0
        %975 = vmatpush2.bf16.msra.mxu0 0
        %976 = vmatprep.subr.bf16.mxu0 0
        %977 = vmatpush2.bf16.msra.mxu0 0
        %978 = vmatprep.subr.bf16.mxu0 0
        %979 = vmatpush2.bf16.msra.mxu0 0
        %980 = vmatprep.subr.bf16.mxu0 0
        %981 = vmatpush2.bf16.msra.mxu0 0
        %982 = vmatprep.subr.bf16.mxu0 0
        %983 = vmatpush2.bf16.msra.mxu0 0
        %984 = vmatprep.subr.bf16.mxu0 0
        %985 = vmatpush2.bf16.msra.mxu0 0
        %986 = vmatprep.mubr.bf16.mxu0 0
        %987 = vmatmul.mubr.bf16.gmra.mxu0 %v949
        %v988 = vpop.f32.mrf.mxu0
        %v989 = vadd.f32 0.0, %v988
        %v990 = vpop.f32.mrf.mxu0
        %v991 = vpop.f32.mrf.mxu0
        %v992 = vpop.f32.mrf.mxu0
        %993 = vdwg.mxu0
        %994 = vrot.lane.b32.xlu0 %v644, 64
        %v995 = vpop.permute.xlu0 %994
        %v997 = vsel %vm655, %v895, 0
        %v1000 = vsel %vm902, %v995, 0
        %1002 = vmatprep.subr.bf16.mxu0 0
        %1003 = vmatpush1.bf16.msra.mxu0 0
        %1004 = vmatprep.subr.bf16.mxu0 0
        %1005 = vmatpush1.bf16.msra.mxu0 0
        %1006 = vmatprep.subr.bf16.mxu0 0
        %1007 = vmatpush1.bf16.msra.mxu0 0
        %1008 = vmatprep.subr.bf16.mxu0 0
        %1009 = vmatpush1.bf16.msra.mxu0 0
        %1010 = vmatprep.subr.bf16.mxu0 0
        %1011 = vmatpush1.bf16.msra.mxu0 0
        %1012 = vmatprep.subr.bf16.mxu0 0
        %1013 = vmatpush1.bf16.msra.mxu0 0
        %1014 = vmatprep.subr.bf16.mxu0 0
        %1015 = vmatpush1.bf16.msra.mxu0 0
        %1016 = vmatprep.subr.bf16.mxu0 0
        %1017 = vmatpush1.bf16.msra.mxu0 %v1000
        %1018 = vmatprep.subr.bf16.mxu0 0
        %1019 = vmatpush2.bf16.msra.mxu0 0
        %1020 = vmatprep.subr.bf16.mxu0 0
        %1021 = vmatpush2.bf16.msra.mxu0 0
        %1022 = vmatprep.subr.bf16.mxu0 0
        %1023 = vmatpush2.bf16.msra.mxu0 0
        %1024 = vmatprep.subr.bf16.mxu0 0
        %1025 = vmatpush2.bf16.msra.mxu0 0
        %1026 = vmatprep.subr.bf16.mxu0 0
        %1027 = vmatpush2.bf16.msra.mxu0 0
        %1028 = vmatprep.subr.bf16.mxu0 0
        %1029 = vmatpush2.bf16.msra.mxu0 0
        %1030 = vmatprep.subr.bf16.mxu0 0
        %1031 = vmatpush2.bf16.msra.mxu0 0
        %1032 = vmatprep.subr.bf16.mxu0 0
        %1033 = vmatpush2.bf16.msra.mxu0 0
        %1034 = vmatprep.mubr.bf16.mxu0 0
        %1035 = vmatmul.mubr.bf16.gmra.mxu0 %v997
        %v1036 = vpop.f32.mrf.mxu0
        %v1037 = vadd.f32 0.0, %v1036
        %v1038 = vpop.f32.mrf.mxu0
        %v1039 = vpop.f32.mrf.mxu0
        %v1040 = vpop.f32.mrf.mxu0
        %1041 = vdwg.mxu0
        %1042 = vrot.lane.b32.xlu0 %v645, 64
        %v1043 = vpop.permute.xlu0 %1042
        %v1045 = vsel %vm655, %v896, 0
        %v1048 = vsel %vm902, %v1043, 0
        %1050 = vmatprep.subr.bf16.mxu0 0
        %1051 = vmatpush1.bf16.msra.mxu0 0
        %1052 = vmatprep.subr.bf16.mxu0 0
        %1053 = vmatpush1.bf16.msra.mxu0 0
        %1054 = vmatprep.subr.bf16.mxu0 0
        %1055 = vmatpush1.bf16.msra.mxu0 0
        %1056 = vmatprep.subr.bf16.mxu0 0
        %1057 = vmatpush1.bf16.msra.mxu0 0
        %1058 = vmatprep.subr.bf16.mxu0 0
        %1059 = vmatpush1.bf16.msra.mxu0 0
        %1060 = vmatprep.subr.bf16.mxu0 0
        %1061 = vmatpush1.bf16.msra.mxu0 0
        %1062 = vmatprep.subr.bf16.mxu0 0
        %1063 = vmatpush1.bf16.msra.mxu0 0
        %1064 = vmatprep.subr.bf16.mxu0 0
        %1065 = vmatpush1.bf16.msra.mxu0 %v1048
        %1066 = vmatprep.subr.bf16.mxu0 0
        %1067 = vmatpush2.bf16.msra.mxu0 0
        %1068 = vmatprep.subr.bf16.mxu0 0
        %1069 = vmatpush2.bf16.msra.mxu0 0
        %1070 = vmatprep.subr.bf16.mxu0 0
        %1071 = vmatpush2.bf16.msra.mxu0 0
        %1072 = vmatprep.subr.bf16.mxu0 0
        %1073 = vmatpush2.bf16.msra.mxu0 0
        %1074 = vmatprep.subr.bf16.mxu0 0
        %1075 = vmatpush2.bf16.msra.mxu0 0
        %1076 = vmatprep.subr.bf16.mxu0 0
        %1077 = vmatpush2.bf16.msra.mxu0 0
        %1078 = vmatprep.subr.bf16.mxu0 0
        %1079 = vmatpush2.bf16.msra.mxu0 0
        %1080 = vmatprep.subr.bf16.mxu0 0
        %1081 = vmatpush2.bf16.msra.mxu0 0
        %1082 = vmatprep.mubr.bf16.mxu0 0
        %1083 = vmatmul.mubr.bf16.gmra.mxu0 %v1045
        %v1084 = vpop.f32.mrf.mxu0
        %v1085 = vadd.f32 0.0, %v1084
        %v1086 = vpop.f32.mrf.mxu0
        %v1087 = vpop.f32.mrf.mxu0
        %v1088 = vpop.f32.mrf.mxu0
        %1089 = vdwg.mxu0
        %1091 = vrot.lane.b32.xlu0 %v989, 8
        %v1092 = vpop.permute.xlu0 %1091
        %1095 = vrot.lane.b32.xlu0 %v1037, 16
        %v1096 = vpop.permute.xlu0 %1095
        %1099 = vrot.lane.b32.xlu0 %v1085, 24
        %v1100 = vpop.permute.xlu0 %1099
        %v1102 = vsel %vm655, %v941, %v1092
        %vm1103 = vcmask 130048
        %v1104 = vsel %vm1103, %v1102, %v1096
        %vm1105 = vcmask 195584
        %v1106 = vsel %vm1105, %v1104, %v1100
        %v1107 = vpack.c.bf16 %v1106, %v1106
        %v1108 = vld [vmem:[%s6] sm:$0xf]
        %v1109 = vld [vmem:[%s6 + $0x4] sm:$0xf]
        %v1110 = vld [vmem:[%s6 + $0x8] sm:$0xf]
        %v1111 = vld [vmem:[%s6 + $0xc] sm:$0xf]
        %v1112 = vld [vmem:[%s7] sm:$0x1]
        %v1114 = vlaneseq
        %v1115 = vshrl.u32 %v1114, 7
        %v1116 = vsub.s32 0, %v1115
        %v1117 = vrot.slane %v1112, %v1116
        %v1123 = vunpack.c.l.b16 %v1108
        %v1124 = vunpack.c.l.b16 %v1109
        %v1125 = vunpack.c.l.b16 %v1110
        %v1126 = vunpack.c.l.b16 %v1111
        %v1127 = vpack.c.b16 %v1124, %v1123
        %v1128 = vpack.c.b16 %v1126, %v1125
        %v1132 = vsel %vm535, %v1107, 0
        %1134 = vmatprep.subr.bf16.mxu0 0
        %1135 = vmatpush1.bf16.msra.mxu0 0
        %1136 = vmatprep.subr.bf16.mxu0 0
        %1137 = vmatpush1.bf16.msra.mxu0 0
        %1138 = vmatprep.subr.bf16.mxu0 0
        %1139 = vmatpush1.bf16.msra.mxu0 0
        %1140 = vmatprep.subr.bf16.mxu0 0
        %1141 = vmatpush1.bf16.msra.mxu0 0
        %1142 = vmatprep.subr.bf16.mxu0 0
        %1143 = vmatpush1.bf16.msra.mxu0 0
        %1144 = vmatprep.subr.bf16.mxu0 0
        %1145 = vmatpush1.bf16.msra.mxu0 0
        %1146 = vmatprep.subr.bf16.mxu0 0
        %1147 = vmatpush1.bf16.msra.mxu0 %v1128
        %1148 = vmatprep.subr.bf16.mxu0 0
        %1149 = vmatpush1.bf16.msra.mxu0 %v1127
        %1150 = vmatprep.subr.bf16.mxu0 0
        %1151 = vmatpush2.bf16.msra.mxu0 0
        %1152 = vmatprep.subr.bf16.mxu0 0
        %1153 = vmatpush2.bf16.msra.mxu0 0
        %1154 = vmatprep.subr.bf16.mxu0 0
        %1155 = vmatpush2.bf16.msra.mxu0 0
        %1156 = vmatprep.subr.bf16.mxu0 0
        %1157 = vmatpush2.bf16.msra.mxu0 0
        %1158 = vmatprep.subr.bf16.mxu0 0
        %1159 = vmatpush2.bf16.msra.mxu0 0
        %1160 = vmatprep.subr.bf16.mxu0 0
        %1161 = vmatpush2.bf16.msra.mxu0 0
        %1162 = vmatprep.subr.bf16.mxu0 0
        %1163 = vmatpush2.bf16.msra.mxu0 0
        %1164 = vmatprep.subr.bf16.mxu0 0
        %1165 = vmatpush2.bf16.msra.mxu0 0
        %1166 = vmatprep.mubr.bf16.mxu0 0
        %1167 = vmatmul.mubr.bf16.gmra.mxu0 %v1132
        %v1168 = vpop.f32.mrf.mxu0
        %v1169 = vadd.f32 %v1117, %v1168
        %v1170 = vpop.f32.mrf.mxu0
        %v1171 = vpop.f32.mrf.mxu0
        %v1172 = vpop.f32.mrf.mxu0
        %1173 = vdwg.mxu0
        %v1174 = vadd.f32 %v1169, %v563
        %v1175 = vld [vmem:[%s8] sm:$0x1]
        %v1176 = vld [vmem:[%s9] sm:$0x1]
        %v1177 = vsel %vm535, %v1174, 0.0
        %1178 = vadd.xlane.f32.xlu0 %v1177
        %v1179 = vpop.xlane.xlu0 %1178
        %v1180 = vmul.f32 %v1179, %v539
        %v1181 = vsub.f32 %v1174, %v1180
        %v1182 = vmul.f32 %v1181, %v1181
        %v1183 = vsel %vm535, %v1182, 0.0
        %1184 = vadd.xlane.f32.xlu0 %v1183
        %v1185 = vpop.xlane.xlu0 %1184
        %v1186 = vmul.f32 %v1185, %v539
        %v1187 = vadd.f32 %v1186, 1e-12
        %v1188 = vrsqrt.pop %v1187
        %v1189 = vmul.f32 %v1181, %v1188
        %v1191 = vlaneseq
        %v1192 = vshrl.u32 %v1191, 7
        %v1193 = vsub.s32 0, %v1192
        %v1194 = vrot.slane %v1175, %v1193
        %v1196 = vmul.f32 %v1189, %v1194
        %v1198 = vlaneseq
        %v1199 = vshrl.u32 %v1198, 7
        %v1200 = vsub.s32 0, %v1199
        %v1201 = vrot.slane %v1176, %v1200
        %v1203 = vadd.f32 %v1196, %v1201
        %v1204 = vpack.c.bf16 %v1203, %v1203
        %v1205 = vld [vmem:[%s10] sm:$0xf]
        %v1206 = vld [vmem:[%s10 + $0x4] sm:$0xf]
        %v1207 = vld [vmem:[%s10 + $0x8] sm:$0xf]
        %v1208 = vld [vmem:[%s10 + $0xc] sm:$0xf]
        %v1209 = vld [vmem:[%s11] sm:$0x1]
        %v1211 = vlaneseq
        %v1212 = vshrl.u32 %v1211, 7
        %v1213 = vsub.s32 0, %v1212
        %v1214 = vrot.slane %v1209, %v1213
        %v1220 = vunpack.c.l.b16 %v1205
        %v1221 = vunpack.c.l.b16 %v1206
        %v1222 = vunpack.c.l.b16 %v1207
        %v1223 = vunpack.c.l.b16 %v1208
        %v1224 = vpack.c.b16 %v1221, %v1220
        %v1225 = vpack.c.b16 %v1223, %v1222
        %v1229 = vsel %vm535, %v1204, 0
        %1231 = vmatprep.subr.bf16.mxu0 0
        %1232 = vmatpush1.bf16.msra.mxu0 0
        %1233 = vmatprep.subr.bf16.mxu0 0
        %1234 = vmatpush1.bf16.msra.mxu0 0
        %1235 = vmatprep.subr.bf16.mxu0 0
        %1236 = vmatpush1.bf16.msra.mxu0 0
        %1237 = vmatprep.subr.bf16.mxu0 0
        %1238 = vmatpush1.bf16.msra.mxu0 0
        %1239 = vmatprep.subr.bf16.mxu0 0
        %1240 = vmatpush1.bf16.msra.mxu0 0
        %1241 = vmatprep.subr.bf16.mxu0 0
        %1242 = vmatpush1.bf16.msra.mxu0 0
        %1243 = vmatprep.subr.bf16.mxu0 0
        %1244 = vmatpush1.bf16.msra.mxu0 %v1225
        %1245 = vmatprep.subr.bf16.mxu0 0
        %1246 = vmatpush1.bf16.msra.mxu0 %v1224
        %1247 = vmatprep.subr.bf16.mxu0 0
        %1248 = vmatpush2.bf16.msra.mxu0 0
        %1249 = vmatprep.subr.bf16.mxu0 0
        %1250 = vmatpush2.bf16.msra.mxu0 0
        %1251 = vmatprep.subr.bf16.mxu0 0
        %1252 = vmatpush2.bf16.msra.mxu0 0
        %1253 = vmatprep.subr.bf16.mxu0 0
        %1254 = vmatpush2.bf16.msra.mxu0 0
        %1255 = vmatprep.subr.bf16.mxu0 0
        %1256 = vmatpush2.bf16.msra.mxu0 0
        %1257 = vmatprep.subr.bf16.mxu0 0
        %1258 = vmatpush2.bf16.msra.mxu0 0
        %1259 = vmatprep.subr.bf16.mxu0 0
        %1260 = vmatpush2.bf16.msra.mxu0 0
        %1261 = vmatprep.subr.bf16.mxu0 0
        %1262 = vmatpush2.bf16.msra.mxu0 0
        %1263 = vmatprep.mubr.bf16.mxu0 0
        %1264 = vmatmul.mubr.bf16.gmra.mxu0 %v1229
        %v1265 = vpop.f32.mrf.mxu0
        %v1266 = vadd.f32 %v1214, %v1265
        %v1267 = vpop.f32.mrf.mxu0
        %v1268 = vpop.f32.mrf.mxu0
        %v1269 = vpop.f32.mrf.mxu0
        %1270 = vdwg.mxu0
        %v1271 = vmul.f32 %v1266, 0.5
        %v1272 = vmul.f32 %v1266, 0.044715
        %v1273 = vmul.f32 %v1272, %v1266
        %v1274 = vmul.f32 %v1273, %v1266
        %v1275 = vadd.f32 %v1266, %v1274
        %v1276 = vmul.f32 %v1275, 0.7978846
        %v1277 = vtanh.pop %v1276
        %v1278 = vadd.f32 %v1277, 1.0
        %v1279 = vmul.f32 %v1271, %v1278
        %v1280 = vpack.c.bf16 %v1279, %v1279
        %v1281 = vld [vmem:[%s12] sm:$0xf]
        %v1282 = vld [vmem:[%s12 + $0x4] sm:$0xf]
        %v1283 = vld [vmem:[%s12 + $0x8] sm:$0xf]
        %v1284 = vld [vmem:[%s12 + $0xc] sm:$0xf]
        %v1285 = vld [vmem:[%s12 + $0x10] sm:$0xf]
        %v1286 = vld [vmem:[%s12 + $0x14] sm:$0xf]
        %v1287 = vld [vmem:[%s12 + $0x18] sm:$0xf]
        %v1288 = vld [vmem:[%s12 + $0x1c] sm:$0xf]
        %v1289 = vld [vmem:[%s13] sm:$0x1]
        %v1291 = vlaneseq
        %v1292 = vshrl.u32 %v1291, 7
        %v1293 = vsub.s32 0, %v1292
        %v1294 = vrot.slane %v1289, %v1293
        %v1304 = vunpack.c.l.b16 %v1281
        %v1305 = vunpack.c.l.b16 %v1282
        %v1306 = vunpack.c.l.b16 %v1283
        %v1307 = vunpack.c.l.b16 %v1284
        %v1308 = vunpack.c.l.b16 %v1285
        %v1309 = vunpack.c.l.b16 %v1286
        %v1310 = vunpack.c.l.b16 %v1287
        %v1311 = vunpack.c.l.b16 %v1288
        %v1312 = vpack.c.b16 %v1305, %v1304
        %v1313 = vpack.c.b16 %v1307, %v1306
        %v1314 = vpack.c.b16 %v1309, %v1308
        %v1315 = vpack.c.b16 %v1311, %v1310
        %vm1320 = vcmask 523264
        %v1322 = vsel %vm1320, %v1280, 0
        %1324 = vmatprep.subr.bf16.mxu0 0
        %1325 = vmatpush1.bf16.msra.mxu0 0
        %1326 = vmatprep.subr.bf16.mxu0 0
        %1327 = vmatpush1.bf16.msra.mxu0 0
        %1328 = vmatprep.subr.bf16.mxu0 0
        %1329 = vmatpush1.bf16.msra.mxu0 0
        %1330 = vmatprep.subr.bf16.mxu0 0
        %1331 = vmatpush1.bf16.msra.mxu0 0
        %1332 = vmatprep.subr.bf16.mxu0 0
        %1333 = vmatpush1.bf16.msra.mxu0 %v1315
        %1334 = vmatprep.subr.bf16.mxu0 0
        %1335 = vmatpush1.bf16.msra.mxu0 %v1314
        %1336 = vmatprep.subr.bf16.mxu0 0
        %1337 = vmatpush1.bf16.msra.mxu0 %v1313
        %1338 = vmatprep.subr.bf16.mxu0 0
        %1339 = vmatpush1.bf16.msra.mxu0 %v1312
        %1340 = vmatprep.subr.bf16.mxu0 0
        %1341 = vmatpush2.bf16.msra.mxu0 0
        %1342 = vmatprep.subr.bf16.mxu0 0
        %1343 = vmatpush2.bf16.msra.mxu0 0
        %1344 = vmatprep.subr.bf16.mxu0 0
        %1345 = vmatpush2.bf16.msra.mxu0 0
        %1346 = vmatprep.subr.bf16.mxu0 0
        %1347 = vmatpush2.bf16.msra.mxu0 0
        %1348 = vmatprep.subr.bf16.mxu0 0
        %1349 = vmatpush2.bf16.msra.mxu0 0
        %1350 = vmatprep.subr.bf16.mxu0 0
        %1351 = vmatpush2.bf16.msra.mxu0 0
        %1352 = vmatprep.subr.bf16.mxu0 0
        %1353 = vmatpush2.bf16.msra.mxu0 0
        %1354 = vmatprep.subr.bf16.mxu0 0
        %1355 = vmatpush2.bf16.msra.mxu0 0
        %1356 = vmatprep.mubr.bf16.mxu0 0
        %1357 = vmatmul.mubr.bf16.gmra.mxu0 %v1322
        %v1358 = vpop.f32.mrf.mxu0
        %v1359 = vadd.f32 %v1294, %v1358
        %v1360 = vpop.f32.mrf.mxu0
        %v1361 = vpop.f32.mrf.mxu0
        %v1362 = vpop.f32.mrf.mxu0
        %1363 = vdwg.mxu0
        %v1364 = vadd.f32 %v1359, %v1203
        %v1365 = vld [vmem:[%s14] sm:$0x1]
        %v1366 = vld [vmem:[%s15] sm:$0x1]
        %v1367 = vsel %vm535, %v1364, 0.0
        %1368 = vadd.xlane.f32.xlu0 %v1367
        %v1369 = vpop.xlane.xlu0 %1368
        %v1370 = vmul.f32 %v1369, %v539
        %v1371 = vsub.f32 %v1364, %v1370
        %v1372 = vmul.f32 %v1371, %v1371
        %v1373 = vsel %vm535, %v1372, 0.0
        %1374 = vadd.xlane.f32.xlu0 %v1373
        %v1375 = vpop.xlane.xlu0 %1374
        %v1376 = vmul.f32 %v1375, %v539
        %v1377 = vadd.f32 %v1376, 1e-12
        %v1378 = vrsqrt.pop %v1377
        %v1379 = vmul.f32 %v1371, %v1378
        %v1381 = vlaneseq
        %v1382 = vshrl.u32 %v1381, 7
        %v1383 = vsub.s32 0, %v1382
        %v1384 = vrot.slane %v1365, %v1383
        %v1386 = vmul.f32 %v1379, %v1384
        %v1388 = vlaneseq
        %v1389 = vshrl.u32 %v1388, 7
        %v1390 = vsub.s32 0, %v1389
        %v1391 = vrot.slane %v1366, %v1390
        %v1393 = vadd.f32 %v1386, %v1391
        %v1394 = vpack.c.bf16 %v1393, %v1393
        %s1395 = scalar_lea.vmem %s4, 16
        %v1396 = vld [vmem:[%s1395] sm:$0xf]
        %v1397 = vld [vmem:[%s1395 + $0x4] sm:$0xf]
        %v1398 = vld [vmem:[%s1395 + $0x8] sm:$0xf]
        %v1399 = vld [vmem:[%s1395 + $0xc] sm:$0xf]
        %s1400 = scalar_lea.vmem %s5, 1
        %v1401 = vld [vmem:[%s1400] sm:$0x1]
        %v1403 = vlaneseq
        %v1404 = vshrl.u32 %v1403, 7
        %v1405 = vsub.s32 0, %v1404
        %v1406 = vrot.slane %v1401, %v1405
        %v1412 = vunpack.c.l.b16 %v1396
        %v1413 = vunpack.c.l.b16 %v1397
        %v1414 = vunpack.c.l.b16 %v1398
        %v1415 = vunpack.c.l.b16 %v1399
        %v1416 = vpack.c.b16 %v1413, %v1412
        %v1417 = vpack.c.b16 %v1415, %v1414
        %v1421 = vsel %vm535, %v1394, 0
        %1423 = vmatprep.subr.bf16.mxu0 0
        %1424 = vmatpush1.bf16.msra.mxu0 0
        %1425 = vmatprep.subr.bf16.mxu0 0
        %1426 = vmatpush1.bf16.msra.mxu0 0
        %1427 = vmatprep.subr.bf16.mxu0 0
        %1428 = vmatpush1.bf16.msra.mxu0 0
        %1429 = vmatprep.subr.bf16.mxu0 0
        %1430 = vmatpush1.bf16.msra.mxu0 0
        %1431 = vmatprep.subr.bf16.mxu0 0
        %1432 = vmatpush1.bf16.msra.mxu0 0
        %1433 = vmatprep.subr.bf16.mxu0 0
        %1434 = vmatpush1.bf16.msra.mxu0 0
        %1435 = vmatprep.subr.bf16.mxu0 0
        %1436 = vmatpush1.bf16.msra.mxu0 %v1417
        %1437 = vmatprep.subr.bf16.mxu0 0
        %1438 = vmatpush1.bf16.msra.mxu0 %v1416
        %1439 = vmatprep.subr.bf16.mxu0 0
        %1440 = vmatpush2.bf16.msra.mxu0 0
        %1441 = vmatprep.subr.bf16.mxu0 0
        %1442 = vmatpush2.bf16.msra.mxu0 0
        %1443 = vmatprep.subr.bf16.mxu0 0
        %1444 = vmatpush2.bf16.msra.mxu0 0
        %1445 = vmatprep.subr.bf16.mxu0 0
        %1446 = vmatpush2.bf16.msra.mxu0 0
        %1447 = vmatprep.subr.bf16.mxu0 0
        %1448 = vmatpush2.bf16.msra.mxu0 0
        %1449 = vmatprep.subr.bf16.mxu0 0
        %1450 = vmatpush2.bf16.msra.mxu0 0
        %1451 = vmatprep.subr.bf16.mxu0 0
        %1452 = vmatpush2.bf16.msra.mxu0 0
        %1453 = vmatprep.subr.bf16.mxu0 0
        %1454 = vmatpush2.bf16.msra.mxu0 0
        %1455 = vmatprep.mubr.bf16.mxu0 0
        %1456 = vmatmul.mubr.bf16.gmra.mxu0 %v1421
        %v1457 = vpop.f32.mrf.mxu0
        %v1458 = vadd.f32 %v1406, %v1457
        %v1459 = vpop.f32.mrf.mxu0
        %v1460 = vpop.f32.mrf.mxu0
        %v1461 = vpop.f32.mrf.mxu0
        %1462 = vdwg.mxu0
        %1464 = vrot.lane.b32.xlu0 %v1458, 120
        %v1465 = vpop.permute.xlu0 %1464
        %1467 = vrot.lane.b32.xlu0 %v1458, 112
        %v1468 = vpop.permute.xlu0 %1467
        %1470 = vrot.lane.b32.xlu0 %v1458, 104
        %v1471 = vpop.permute.xlu0 %1470
        %v1473 = vpack.c.bf16 %v1458, %v1458
        %v1474 = vpack.c.bf16 %v1465, %v1465
        %v1475 = vpack.c.bf16 %v1468, %v1468
        %v1476 = vpack.c.bf16 %v1471, %v1471
        %1478 = vrot.lane.b32.xlu0 %v1473, 96
        %v1479 = vpop.permute.xlu0 %1478
        %v1481 = vsel %vm655, %v1473, 0
        %v1484 = vsel %vm655, %v1479, 0
        %1486 = vmatprep.subr.bf16.mxu0 0
        %1487 = vmatpush1.bf16.xpose.msra.mxu0 0
        %1488 = vmatprep.subr.bf16.mxu0 0
        %1489 = vmatpush1.bf16.xpose.msra.mxu0 0
        %1490 = vmatprep.subr.bf16.mxu0 0
        %1491 = vmatpush1.bf16.xpose.msra.mxu0 0
        %1492 = vmatprep.subr.bf16.mxu0 0
        %1493 = vmatpush1.bf16.xpose.msra.mxu0 0
        %1494 = vmatprep.subr.bf16.mxu0 0
        %1495 = vmatpush1.bf16.xpose.msra.mxu0 0
        %1496 = vmatprep.subr.bf16.mxu0 0
        %1497 = vmatpush1.bf16.xpose.msra.mxu0 0
        %1498 = vmatprep.subr.bf16.mxu0 0
        %1499 = vmatpush1.bf16.xpose.msra.mxu0 0
        %1500 = vmatprep.subr.bf16.mxu0 0
        %1501 = vmatpush1.bf16.xpose.msra.mxu0 %v1484
        %1502 = vmatprep.subr.bf16.mxu0 0
        %1503 = vmatpush2.bf16.xpose.msra.mxu0 0
        %1504 = vmatprep.subr.bf16.mxu0 0
        %1505 = vmatpush2.bf16.xpose.msra.mxu0 0
        %1506 = vmatprep.subr.bf16.mxu0 0
        %1507 = vmatpush2.bf16.xpose.msra.mxu0 0
        %1508 = vmatprep.subr.bf16.mxu0 0
        %1509 = vmatpush2.bf16.xpose.msra.mxu0 0
        %1510 = vmatprep.subr.bf16.mxu0 0
        %1511 = vmatpush2.bf16.xpose.msra.mxu0 0
        %1512 = vmatprep.subr.bf16.mxu0 0
        %1513 = vmatpush2.bf16.xpose.msra.mxu0 0
        %1514 = vmatprep.subr.bf16.mxu0 0
        %1515 = vmatpush2.bf16.xpose.msra.mxu0 0
        %1516 = vmatprep.subr.bf16.mxu0 0
        %1517 = vmatpush2.bf16.xpose.msra.mxu0 0
        %1518 = vmatprep.mubr.bf16.mxu0 0
        %1519 = vmatmul.mubr.bf16.gmra.mxu0 %v1481
        %v1520 = vpop.f32.mrf.mxu0
        %v1521 = vadd.f32 %v650, %v1520
        %v1522 = vpop.f32.mrf.mxu0
        %v1523 = vpop.f32.mrf.mxu0
        %v1524 = vpop.f32.mrf.mxu0
        %1525 = vdwg.mxu0
        %1527 = vrot.lane.b32.xlu0 %v1474, 96
        %v1528 = vpop.permute.xlu0 %1527
        %v1530 = vsel %vm655, %v1474, 0
        %v1533 = vsel %vm655, %v1528, 0
        %1535 = vmatprep.subr.bf16.mxu0 0
        %1536 = vmatpush1.bf16.xpose.msra.mxu0 0
        %1537 = vmatprep.subr.bf16.mxu0 0
        %1538 = vmatpush1.bf16.xpose.msra.mxu0 0
        %1539 = vmatprep.subr.bf16.mxu0 0
        %1540 = vmatpush1.bf16.xpose.msra.mxu0 0
        %1541 = vmatprep.subr.bf16.mxu0 0
        %1542 = vmatpush1.bf16.xpose.msra.mxu0 0
        %1543 = vmatprep.subr.bf16.mxu0 0
        %1544 = vmatpush1.bf16.xpose.msra.mxu0 0
        %1545 = vmatprep.subr.bf16.mxu0 0
        %1546 = vmatpush1.bf16.xpose.msra.mxu0 0
        %1547 = vmatprep.subr.bf16.mxu0 0
        %1548 = vmatpush1.bf16.xpose.msra.mxu0 0
        %1549 = vmatprep.subr.bf16.mxu0 0
        %1550 = vmatpush1.bf16.xpose.msra.mxu0 %v1533
        %1551 = vmatprep.subr.bf16.mxu0 0
        %1552 = vmatpush2.bf16.xpose.msra.mxu0 0
        %1553 = vmatprep.subr.bf16.mxu0 0
        %1554 = vmatpush2.bf16.xpose.msra.mxu0 0
        %1555 = vmatprep.subr.bf16.mxu0 0
        %1556 = vmatpush2.bf16.xpose.msra.mxu0 0
        %1557 = vmatprep.subr.bf16.mxu0 0
        %1558 = vmatpush2.bf16.xpose.msra.mxu0 0
        %1559 = vmatprep.subr.bf16.mxu0 0
        %1560 = vmatpush2.bf16.xpose.msra.mxu0 0
        %1561 = vmatprep.subr.bf16.mxu0 0
        %1562 = vmatpush2.bf16.xpose.msra.mxu0 0
        %1563 = vmatprep.subr.bf16.mxu0 0
        %1564 = vmatpush2.bf16.xpose.msra.mxu0 0
        %1565 = vmatprep.subr.bf16.mxu0 0
        %1566 = vmatpush2.bf16.xpose.msra.mxu0 0
        %1567 = vmatprep.mubr.bf16.mxu0 0
        %1568 = vmatmul.mubr.bf16.gmra.mxu0 %v1530
        %v1569 = vpop.f32.mrf.mxu0
        %v1570 = vadd.f32 %v650, %v1569
        %v1571 = vpop.f32.mrf.mxu0
        %v1572 = vpop.f32.mrf.mxu0
        %v1573 = vpop.f32.mrf.mxu0
        %1574 = vdwg.mxu0
        %1576 = vrot.lane.b32.xlu0 %v1475, 96
        %v1577 = vpop.permute.xlu0 %1576
        %v1579 = vsel %vm655, %v1475, 0
        %v1582 = vsel %vm655, %v1577, 0
        %1584 = vmatprep.subr.bf16.mxu0 0
        %1585 = vmatpush1.bf16.xpose.msra.mxu0 0
        %1586 = vmatprep.subr.bf16.mxu0 0
        %1587 = vmatpush1.bf16.xpose.msra.mxu0 0
        %1588 = vmatprep.subr.bf16.mxu0 0
        %1589 = vmatpush1.bf16.xpose.msra.mxu0 0
        %1590 = vmatprep.subr.bf16.mxu0 0
        %1591 = vmatpush1.bf16.xpose.msra.mxu0 0
        %1592 = vmatprep.subr.bf16.mxu0 0
        %1593 = vmatpush1.bf16.xpose.msra.mxu0 0
        %1594 = vmatprep.subr.bf16.mxu0 0
        %1595 = vmatpush1.bf16.xpose.msra.mxu0 0
        %1596 = vmatprep.subr.bf16.mxu0 0
        %1597 = vmatpush1.bf16.xpose.msra.mxu0 0
        %1598 = vmatprep.subr.bf16.mxu0 0
        %1599 = vmatpush1.bf16.xpose.msra.mxu0 %v1582
        %1600 = vmatprep.subr.bf16.mxu0 0
        %1601 = vmatpush2.bf16.xpose.msra.mxu0 0
        %1602 = vmatprep.subr.bf16.mxu0 0
        %1603 = vmatpush2.bf16.xpose.msra.mxu0 0
        %1604 = vmatprep.subr.bf16.mxu0 0
        %1605 = vmatpush2.bf16.xpose.msra.mxu0 0
        %1606 = vmatprep.subr.bf16.mxu0 0
        %1607 = vmatpush2.bf16.xpose.msra.mxu0 0
        %1608 = vmatprep.subr.bf16.mxu0 0
        %1609 = vmatpush2.bf16.xpose.msra.mxu0 0
        %1610 = vmatprep.subr.bf16.mxu0 0
        %1611 = vmatpush2.bf16.xpose.msra.mxu0 0
        %1612 = vmatprep.subr.bf16.mxu0 0
        %1613 = vmatpush2.bf16.xpose.msra.mxu0 0
        %1614 = vmatprep.subr.bf16.mxu0 0
        %1615 = vmatpush2.bf16.xpose.msra.mxu0 0
        %1616 = vmatprep.mubr.bf16.mxu0 0
        %1617 = vmatmul.mubr.bf16.gmra.mxu0 %v1579
        %v1618 = vpop.f32.mrf.mxu0
        %v1619 = vadd.f32 %v650, %v1618
        %v1620 = vpop.f32.mrf.mxu0
        %v1621 = vpop.f32.mrf.mxu0
        %v1622 = vpop.f32.mrf.mxu0
        %1623 = vdwg.mxu0
        %1625 = vrot.lane.b32.xlu0 %v1476, 96
        %v1626 = vpop.permute.xlu0 %1625
        %v1628 = vsel %vm655, %v1476, 0
        %v1631 = vsel %vm655, %v1626, 0
        %1633 = vmatprep.subr.bf16.mxu0 0
        %1634 = vmatpush1.bf16.xpose.msra.mxu0 0
        %1635 = vmatprep.subr.bf16.mxu0 0
        %1636 = vmatpush1.bf16.xpose.msra.mxu0 0
        %1637 = vmatprep.subr.bf16.mxu0 0
        %1638 = vmatpush1.bf16.xpose.msra.mxu0 0
        %1639 = vmatprep.subr.bf16.mxu0 0
        %1640 = vmatpush1.bf16.xpose.msra.mxu0 0
        %1641 = vmatprep.subr.bf16.mxu0 0
        %1642 = vmatpush1.bf16.xpose.msra.mxu0 0
        %1643 = vmatprep.subr.bf16.mxu0 0
        %1644 = vmatpush1.bf16.xpose.msra.mxu0 0
        %1645 = vmatprep.subr.bf16.mxu0 0
        %1646 = vmatpush1.bf16.xpose.msra.mxu0 0
        %1647 = vmatprep.subr.bf16.mxu0 0
        %1648 = vmatpush1.bf16.xpose.msra.mxu0 %v1631
        %1649 = vmatprep.subr.bf16.mxu0 0
        %1650 = vmatpush2.bf16.xpose.msra.mxu0 0
        %1651 = vmatprep.subr.bf16.mxu0 0
        %1652 = vmatpush2.bf16.xpose.msra.mxu0 0
        %1653 = vmatprep.subr.bf16.mxu0 0
        %1654 = vmatpush2.bf16.xpose.msra.mxu0 0
        %1655 = vmatprep.subr.bf16.mxu0 0
        %1656 = vmatpush2.bf16.xpose.msra.mxu0 0
        %1657 = vmatprep.subr.bf16.mxu0 0
        %1658 = vmatpush2.bf16.xpose.msra.mxu0 0
        %1659 = vmatprep.subr.bf16.mxu0 0
        %1660 = vmatpush2.bf16.xpose.msra.mxu0 0
        %1661 = vmatprep.subr.bf16.mxu0 0
        %1662 = vmatpush2.bf16.xpose.msra.mxu0 0
        %1663 = vmatprep.subr.bf16.mxu0 0
        %1664 = vmatpush2.bf16.xpose.msra.mxu0 0
        %1665 = vmatprep.mubr.bf16.mxu0 0
        %1666 = vmatmul.mubr.bf16.gmra.mxu0 %v1628
        %v1667 = vpop.f32.mrf.mxu0
        %v1668 = vadd.f32 %v650, %v1667
        %v1669 = vpop.f32.mrf.mxu0
        %v1670 = vpop.f32.mrf.mxu0
        %v1671 = vpop.f32.mrf.mxu0
        %1672 = vdwg.mxu0
        %v1673 = vsel %vm655, %v1521, -inf
        %1674 = vmax.xlane.f32.xlu0 %v1673
        %v1675 = vpop.xlane.xlu0 %1674
        %v1676 = vsel %vm655, %v1570, -inf
        %1677 = vmax.xlane.f32.xlu0 %v1676
        %v1678 = vpop.xlane.xlu0 %1677
        %v1679 = vsel %vm655, %v1619, -inf
        %1680 = vmax.xlane.f32.xlu0 %v1679
        %v1681 = vpop.xlane.xlu0 %1680
        %v1682 = vsel %vm655, %v1668, -inf
        %1683 = vmax.xlane.f32.xlu0 %v1682
        %v1684 = vpop.xlane.xlu0 %1683
        %v1685 = vsub.f32 %v1521, %v1675
        %v1686 = vsub.f32 %v1570, %v1678
        %v1687 = vsub.f32 %v1619, %v1681
        %v1688 = vsub.f32 %v1668, %v1684
        %v1689 = vmul.f32 %v1685, 1.442695
        %v1690 = vpow.pop %v1689
        %v1691 = vmul.f32 %v1686, 1.442695
        %v1692 = vpow.pop %v1691
        %v1693 = vmul.f32 %v1687, 1.442695
        %v1694 = vpow.pop %v1693
        %v1695 = vmul.f32 %v1688, 1.442695
        %v1696 = vpow.pop %v1695
        %v1697 = vsel %vm655, %v1690, 0.0
        %1698 = vadd.xlane.f32.xlu0 %v1697
        %v1699 = vpop.xlane.xlu0 %1698
        %v1700 = vsel %vm655, %v1692, 0.0
        %1701 = vadd.xlane.f32.xlu0 %v1700
        %v1702 = vpop.xlane.xlu0 %1701
        %v1703 = vsel %vm655, %v1694, 0.0
        %1704 = vadd.xlane.f32.xlu0 %v1703
        %v1705 = vpop.xlane.xlu0 %1704
        %v1706 = vsel %vm655, %v1696, 0.0
        %1707 = vadd.xlane.f32.xlu0 %v1706
        %v1708 = vpop.xlane.xlu0 %1707
        %v1709 = vrcp.pop %v1699
        %v1710 = vrcp.pop %v1702
        %v1711 = vrcp.pop %v1705
        %v1712 = vrcp.pop %v1708
        %v1713 = vmul.f32 %v1690, %v1709
        %v1714 = vmul.f32 %v1692, %v1710
        %v1715 = vmul.f32 %v1694, %v1711
        %v1716 = vmul.f32 %v1696, %v1712
        %v1717 = vpack.c.bf16 %v1713, %v1713
        %v1718 = vpack.c.bf16 %v1714, %v1714
        %v1719 = vpack.c.bf16 %v1715, %v1715
        %v1720 = vpack.c.bf16 %v1716, %v1716
        %1721 = vrot.lane.b32.xlu0 %v1473, 64
        %v1722 = vpop.permute.xlu0 %1721
        %v1724 = vsel %vm655, %v1717, 0
        %v1727 = vsel %vm902, %v1722, 0
        %1729 = vmatprep.subr.bf16.mxu0 0
        %1730 = vmatpush1.bf16.msra.mxu0 0
        %1731 = vmatprep.subr.bf16.mxu0 0
        %1732 = vmatpush1.bf16.msra.mxu0 0
        %1733 = vmatprep.subr.bf16.mxu0 0
        %1734 = vmatpush1.bf16.msra.mxu0 0
        %1735 = vmatprep.subr.bf16.mxu0 0
        %1736 = vmatpush1.bf16.msra.mxu0 0
        %1737 = vmatprep.subr.bf16.mxu0 0
        %1738 = vmatpush1.bf16.msra.mxu0 0
        %1739 = vmatprep.subr.bf16.mxu0 0
        %1740 = vmatpush1.bf16.msra.mxu0 0
        %1741 = vmatprep.subr.bf16.mxu0 0
        %1742 = vmatpush1.bf16.msra.mxu0 0
        %1743 = vmatprep.subr.bf16.mxu0 0
        %1744 = vmatpush1.bf16.msra.mxu0 %v1727
        %1745 = vmatprep.subr.bf16.mxu0 0
        %1746 = vmatpush2.bf16.msra.mxu0 0
        %1747 = vmatprep.subr.bf16.mxu0 0
        %1748 = vmatpush2.bf16.msra.mxu0 0
        %1749 = vmatprep.subr.bf16.mxu0 0
        %1750 = vmatpush2.bf16.msra.mxu0 0
        %1751 = vmatprep.subr.bf16.mxu0 0
        %1752 = vmatpush2.bf16.msra.mxu0 0
        %1753 = vmatprep.subr.bf16.mxu0 0
        %1754 = vmatpush2.bf16.msra.mxu0 0
        %1755 = vmatprep.subr.bf16.mxu0 0
        %1756 = vmatpush2.bf16.msra.mxu0 0
        %1757 = vmatprep.subr.bf16.mxu0 0
        %1758 = vmatpush2.bf16.msra.mxu0 0
        %1759 = vmatprep.subr.bf16.mxu0 0
        %1760 = vmatpush2.bf16.msra.mxu0 0
        %1761 = vmatprep.mubr.bf16.mxu0 0
        %1762 = vmatmul.mubr.bf16.gmra.mxu0 %v1724
        %v1763 = vpop.f32.mrf.mxu0
        %v1764 = vadd.f32 0.0, %v1763
        %v1765 = vpop.f32.mrf.mxu0
        %v1766 = vpop.f32.mrf.mxu0
        %v1767 = vpop.f32.mrf.mxu0
        %1768 = vdwg.mxu0
        %1769 = vrot.lane.b32.xlu0 %v1474, 64
        %v1770 = vpop.permute.xlu0 %1769
        %v1772 = vsel %vm655, %v1718, 0
        %v1775 = vsel %vm902, %v1770, 0
        %1777 = vmatprep.subr.bf16.mxu0 0
        %1778 = vmatpush1.bf16.msra.mxu0 0
        %1779 = vmatprep.subr.bf16.mxu0 0
        %1780 = vmatpush1.bf16.msra.mxu0 0
        %1781 = vmatprep.subr.bf16.mxu0 0
        %1782 = vmatpush1.bf16.msra.mxu0 0
        %1783 = vmatprep.subr.bf16.mxu0 0
        %1784 = vmatpush1.bf16.msra.mxu0 0
        %1785 = vmatprep.subr.bf16.mxu0 0
        %1786 = vmatpush1.bf16.msra.mxu0 0
        %1787 = vmatprep.subr.bf16.mxu0 0
        %1788 = vmatpush1.bf16.msra.mxu0 0
        %1789 = vmatprep.subr.bf16.mxu0 0
        %1790 = vmatpush1.bf16.msra.mxu0 0
        %1791 = vmatprep.subr.bf16.mxu0 0
        %1792 = vmatpush1.bf16.msra.mxu0 %v1775
        %1793 = vmatprep.subr.bf16.mxu0 0
        %1794 = vmatpush2.bf16.msra.mxu0 0
        %1795 = vmatprep.subr.bf16.mxu0 0
        %1796 = vmatpush2.bf16.msra.mxu0 0
        %1797 = vmatprep.subr.bf16.mxu0 0
        %1798 = vmatpush2.bf16.msra.mxu0 0
        %1799 = vmatprep.subr.bf16.mxu0 0
        %1800 = vmatpush2.bf16.msra.mxu0 0
        %1801 = vmatprep.subr.bf16.mxu0 0
        %1802 = vmatpush2.bf16.msra.mxu0 0
        %1803 = vmatprep.subr.bf16.mxu0 0
        %1804 = vmatpush2.bf16.msra.mxu0 0
        %1805 = vmatprep.subr.bf16.mxu0 0
        %1806 = vmatpush2.bf16.msra.mxu0 0
        %1807 = vmatprep.subr.bf16.mxu0 0
        %1808 = vmatpush2.bf16.msra.mxu0 0
        %1809 = vmatprep.mubr.bf16.mxu0 0
        %1810 = vmatmul.mubr.bf16.gmra.mxu0 %v1772
        %v1811 = vpop.f32.mrf.mxu0
        %v1812 = vadd.f32 0.0, %v1811
        %v1813 = vpop.f32.mrf.mxu0
        %v1814 = vpop.f32.mrf.mxu0
        %v1815 = vpop.f32.mrf.mxu0
        %1816 = vdwg.mxu0
        %1817 = vrot.lane.b32.xlu0 %v1475, 64
        %v1818 = vpop.permute.xlu0 %1817
        %v1820 = vsel %vm655, %v1719, 0
        %v1823 = vsel %vm902, %v1818, 0
        %1825 = vmatprep.subr.bf16.mxu0 0
        %1826 = vmatpush1.bf16.msra.mxu0 0
        %1827 = vmatprep.subr.bf16.mxu0 0
        %1828 = vmatpush1.bf16.msra.mxu0 0
        %1829 = vmatprep.subr.bf16.mxu0 0
        %1830 = vmatpush1.bf16.msra.mxu0 0
        %1831 = vmatprep.subr.bf16.mxu0 0
        %1832 = vmatpush1.bf16.msra.mxu0 0
        %1833 = vmatprep.subr.bf16.mxu0 0
        %1834 = vmatpush1.bf16.msra.mxu0 0
        %1835 = vmatprep.subr.bf16.mxu0 0
        %1836 = vmatpush1.bf16.msra.mxu0 0
        %1837 = vmatprep.subr.bf16.mxu0 0
        %1838 = vmatpush1.bf16.msra.mxu0 0
        %1839 = vmatprep.subr.bf16.mxu0 0
        %1840 = vmatpush1.bf16.msra.mxu0 %v1823
        %1841 = vmatprep.subr.bf16.mxu0 0
        %1842 = vmatpush2.bf16.msra.mxu0 0
        %1843 = vmatprep.subr.bf16.mxu0 0
        %1844 = vmatpush2.bf16.msra.mxu0 0
        %1845 = vmatprep.subr.bf16.mxu0 0
        %1846 = vmatpush2.bf16.msra.mxu0 0
        %1847 = vmatprep.subr.bf16.mxu0 0
        %1848 = vmatpush2.bf16.msra.mxu0 0
        %1849 = vmatprep.subr.bf16.mxu0 0
        %1850 = vmatpush2.bf16.msra.mxu0 0
        %1851 = vmatprep.subr.bf16.mxu0 0
        %1852 = vmatpush2.bf16.msra.mxu0 0
        %1853 = vmatprep.subr.bf16.mxu0 0
        %1854 = vmatpush2.bf16.msra.mxu0 0
        %1855 = vmatprep.subr.bf16.mxu0 0
        %1856 = vmatpush2.bf16.msra.mxu0 0
        %1857 = vmatprep.mubr.bf16.mxu0 0
        %1858 = vmatmul.mubr.bf16.gmra.mxu0 %v1820
        %v1859 = vpop.f32.mrf.mxu0
        %v1860 = vadd.f32 0.0, %v1859
        %v1861 = vpop.f32.mrf.mxu0
        %v1862 = vpop.f32.mrf.mxu0
        %v1863 = vpop.f32.mrf.mxu0
        %1864 = vdwg.mxu0
        %1865 = vrot.lane.b32.xlu0 %v1476, 64
        %v1866 = vpop.permute.xlu0 %1865
        %v1868 = vsel %vm655, %v1720, 0
        %v1871 = vsel %vm902, %v1866, 0
        %1873 = vmatprep.subr.bf16.mxu0 0
        %1874 = vmatpush1.bf16.msra.mxu0 0
        %1875 = vmatprep.subr.bf16.mxu0 0
        %1876 = vmatpush1.bf16.msra.mxu0 0
        %1877 = vmatprep.subr.bf16.mxu0 0
        %1878 = vmatpush1.bf16.msra.mxu0 0
        %1879 = vmatprep.subr.bf16.mxu0 0
        %1880 = vmatpush1.bf16.msra.mxu0 0
        %1881 = vmatprep.subr.bf16.mxu0 0
        %1882 = vmatpush1.bf16.msra.mxu0 0
        %1883 = vmatprep.subr.bf16.mxu0 0
        %1884 = vmatpush1.bf16.msra.mxu0 0
        %1885 = vmatprep.subr.bf16.mxu0 0
        %1886 = vmatpush1.bf16.msra.mxu0 0
        %1887 = vmatprep.subr.bf16.mxu0 0
        %1888 = vmatpush1.bf16.msra.mxu0 %v1871
        %1889 = vmatprep.subr.bf16.mxu0 0
        %1890 = vmatpush2.bf16.msra.mxu0 0
        %1891 = vmatprep.subr.bf16.mxu0 0
        %1892 = vmatpush2.bf16.msra.mxu0 0
        %1893 = vmatprep.subr.bf16.mxu0 0
        %1894 = vmatpush2.bf16.msra.mxu0 0
        %1895 = vmatprep.subr.bf16.mxu0 0
        %1896 = vmatpush2.bf16.msra.mxu0 0
        %1897 = vmatprep.subr.bf16.mxu0 0
        %1898 = vmatpush2.bf16.msra.mxu0 0
        %1899 = vmatprep.subr.bf16.mxu0 0
        %1900 = vmatpush2.bf16.msra.mxu0 0
        %1901 = vmatprep.subr.bf16.mxu0 0
        %1902 = vmatpush2.bf16.msra.mxu0 0
        %1903 = vmatprep.subr.bf16.mxu0 0
        %1904 = vmatpush2.bf16.msra.mxu0 0
        %1905 = vmatprep.mubr.bf16.mxu0 0
        %1906 = vmatmul.mubr.bf16.gmra.mxu0 %v1868
        %v1907 = vpop.f32.mrf.mxu0
        %v1908 = vadd.f32 0.0, %v1907
        %v1909 = vpop.f32.mrf.mxu0
        %v1910 = vpop.f32.mrf.mxu0
        %v1911 = vpop.f32.mrf.mxu0
        %1912 = vdwg.mxu0
        %1914 = vrot.lane.b32.xlu0 %v1812, 8
        %v1915 = vpop.permute.xlu0 %1914
        %1918 = vrot.lane.b32.xlu0 %v1860, 16
        %v1919 = vpop.permute.xlu0 %1918
        %1922 = vrot.lane.b32.xlu0 %v1908, 24
        %v1923 = vpop.permute.xlu0 %1922
        %v1925 = vsel %vm655, %v1764, %v1915
        %v1926 = vsel %vm1103, %v1925, %v1919
        %v1927 = vsel %vm1105, %v1926, %v1923
        %v1928 = vpack.c.bf16 %v1927, %v1927
        %s1929 = scalar_lea.vmem %s6, 16
        %v1930 = vld [vmem:[%s1929] sm:$0xf]
        %v1931 = vld [vmem:[%s1929 + $0x4] sm:$0xf]
        %v1932 = vld [vmem:[%s1929 + $0x8] sm:$0xf]
        %v1933 = vld [vmem:[%s1929 + $0xc] sm:$0xf]
        %s1934 = scalar_lea.vmem %s7, 1
        %v1935 = vld [vmem:[%s1934] sm:$0x1]
        %v1937 = vlaneseq
        %v1938 = vshrl.u32 %v1937, 7
        %v1939 = vsub.s32 0, %v1938
        %v1940 = vrot.slane %v1935, %v1939
        %v1946 = vunpack.c.l.b16 %v1930
        %v1947 = vunpack.c.l.b16 %v1931
        %v1948 = vunpack.c.l.b16 %v1932
        %v1949 = vunpack.c.l.b16 %v1933
        %v1950 = vpack.c.b16 %v1947, %v1946
        %v1951 = vpack.c.b16 %v1949, %v1948
        %v1955 = vsel %vm535, %v1928, 0
        %1957 = vmatprep.subr.bf16.mxu0 0
        %1958 = vmatpush1.bf16.msra.mxu0 0
        %1959 = vmatprep.subr.bf16.mxu0 0
        %1960 = vmatpush1.bf16.msra.mxu0 0
        %1961 = vmatprep.subr.bf16.mxu0 0
        %1962 = vmatpush1.bf16.msra.mxu0 0
        %1963 = vmatprep.subr.bf16.mxu0 0
        %1964 = vmatpush1.bf16.msra.mxu0 0
        %1965 = vmatprep.subr.bf16.mxu0 0
        %1966 = vmatpush1.bf16.msra.mxu0 0
        %1967 = vmatprep.subr.bf16.mxu0 0
        %1968 = vmatpush1.bf16.msra.mxu0 0
        %1969 = vmatprep.subr.bf16.mxu0 0
        %1970 = vmatpush1.bf16.msra.mxu0 %v1951
        %1971 = vmatprep.subr.bf16.mxu0 0
        %1972 = vmatpush1.bf16.msra.mxu0 %v1950
        %1973 = vmatprep.subr.bf16.mxu0 0
        %1974 = vmatpush2.bf16.msra.mxu0 0
        %1975 = vmatprep.subr.bf16.mxu0 0
        %1976 = vmatpush2.bf16.msra.mxu0 0
        %1977 = vmatprep.subr.bf16.mxu0 0
        %1978 = vmatpush2.bf16.msra.mxu0 0
        %1979 = vmatprep.subr.bf16.mxu0 0
        %1980 = vmatpush2.bf16.msra.mxu0 0
        %1981 = vmatprep.subr.bf16.mxu0 0
        %1982 = vmatpush2.bf16.msra.mxu0 0
        %1983 = vmatprep.subr.bf16.mxu0 0
        %1984 = vmatpush2.bf16.msra.mxu0 0
        %1985 = vmatprep.subr.bf16.mxu0 0
        %1986 = vmatpush2.bf16.msra.mxu0 0
        %1987 = vmatprep.subr.bf16.mxu0 0
        %1988 = vmatpush2.bf16.msra.mxu0 0
        %1989 = vmatprep.mubr.bf16.mxu0 0
        %1990 = vmatmul.mubr.bf16.gmra.mxu0 %v1955
        %v1991 = vpop.f32.mrf.mxu0
        %v1992 = vadd.f32 %v1940, %v1991
        %v1993 = vpop.f32.mrf.mxu0
        %v1994 = vpop.f32.mrf.mxu0
        %v1995 = vpop.f32.mrf.mxu0
        %1996 = vdwg.mxu0
        %v1997 = vadd.f32 %v1992, %v1393
        %s1998 = scalar_lea.vmem %s8, 1
        %v1999 = vld [vmem:[%s1998] sm:$0x1]
        %s2000 = scalar_lea.vmem %s9, 1
        %v2001 = vld [vmem:[%s2000] sm:$0x1]
        %v2002 = vsel %vm535, %v1997, 0.0
        %2003 = vadd.xlane.f32.xlu0 %v2002
        %v2004 = vpop.xlane.xlu0 %2003
        %v2005 = vmul.f32 %v2004, %v539
        %v2006 = vsub.f32 %v1997, %v2005
        %v2007 = vmul.f32 %v2006, %v2006
        %v2008 = vsel %vm535, %v2007, 0.0
        %2009 = vadd.xlane.f32.xlu0 %v2008
        %v2010 = vpop.xlane.xlu0 %2009
        %v2011 = vmul.f32 %v2010, %v539
        %v2012 = vadd.f32 %v2011, 1e-12
        %v2013 = vrsqrt.pop %v2012
        %v2014 = vmul.f32 %v2006, %v2013
        %v2016 = vlaneseq
        %v2017 = vshrl.u32 %v2016, 7
        %v2018 = vsub.s32 0, %v2017
        %v2019 = vrot.slane %v1999, %v2018
        %v2021 = vmul.f32 %v2014, %v2019
        %v2023 = vlaneseq
        %v2024 = vshrl.u32 %v2023, 7
        %v2025 = vsub.s32 0, %v2024
        %v2026 = vrot.slane %v2001, %v2025
        %v2028 = vadd.f32 %v2021, %v2026
        %v2029 = vpack.c.bf16 %v2028, %v2028
        %s2030 = scalar_lea.vmem %s10, 16
        %v2031 = vld [vmem:[%s2030] sm:$0xf]
        %v2032 = vld [vmem:[%s2030 + $0x4] sm:$0xf]
        %v2033 = vld [vmem:[%s2030 + $0x8] sm:$0xf]
        %v2034 = vld [vmem:[%s2030 + $0xc] sm:$0xf]
        %s2035 = scalar_lea.vmem %s11, 1
        %v2036 = vld [vmem:[%s2035] sm:$0x1]
        %v2038 = vlaneseq
        %v2039 = vshrl.u32 %v2038, 7
        %v2040 = vsub.s32 0, %v2039
        %v2041 = vrot.slane %v2036, %v2040
        %v2047 = vunpack.c.l.b16 %v2031
        %v2048 = vunpack.c.l.b16 %v2032
        %v2049 = vunpack.c.l.b16 %v2033
        %v2050 = vunpack.c.l.b16 %v2034
        %v2051 = vpack.c.b16 %v2048, %v2047
        %v2052 = vpack.c.b16 %v2050, %v2049
        %v2056 = vsel %vm535, %v2029, 0
        %2058 = vmatprep.subr.bf16.mxu0 0
        %2059 = vmatpush1.bf16.msra.mxu0 0
        %2060 = vmatprep.subr.bf16.mxu0 0
        %2061 = vmatpush1.bf16.msra.mxu0 0
        %2062 = vmatprep.subr.bf16.mxu0 0
        %2063 = vmatpush1.bf16.msra.mxu0 0
        %2064 = vmatprep.subr.bf16.mxu0 0
        %2065 = vmatpush1.bf16.msra.mxu0 0
        %2066 = vmatprep.subr.bf16.mxu0 0
        %2067 = vmatpush1.bf16.msra.mxu0 0
        %2068 = vmatprep.subr.bf16.mxu0 0
        %2069 = vmatpush1.bf16.msra.mxu0 0
        %2070 = vmatprep.subr.bf16.mxu0 0
        %2071 = vmatpush1.bf16.msra.mxu0 %v2052
        %2072 = vmatprep.subr.bf16.mxu0 0
        %2073 = vmatpush1.bf16.msra.mxu0 %v2051
        %2074 = vmatprep.subr.bf16.mxu0 0
        %2075 = vmatpush2.bf16.msra.mxu0 0
        %2076 = vmatprep.subr.bf16.mxu0 0
        %2077 = vmatpush2.bf16.msra.mxu0 0
        %2078 = vmatprep.subr.bf16.mxu0 0
        %2079 = vmatpush2.bf16.msra.mxu0 0
        %2080 = vmatprep.subr.bf16.mxu0 0
        %2081 = vmatpush2.bf16.msra.mxu0 0
        %2082 = vmatprep.subr.bf16.mxu0 0
        %2083 = vmatpush2.bf16.msra.mxu0 0
        %2084 = vmatprep.subr.bf16.mxu0 0
        %2085 = vmatpush2.bf16.msra.mxu0 0
        %2086 = vmatprep.subr.bf16.mxu0 0
        %2087 = vmatpush2.bf16.msra.mxu0 0
        %2088 = vmatprep.subr.bf16.mxu0 0
        %2089 = vmatpush2.bf16.msra.mxu0 0
        %2090 = vmatprep.mubr.bf16.mxu0 0
        %2091 = vmatmul.mubr.bf16.gmra.mxu0 %v2056
        %v2092 = vpop.f32.mrf.mxu0
        %v2093 = vadd.f32 %v2041, %v2092
        %v2094 = vpop.f32.mrf.mxu0
        %v2095 = vpop.f32.mrf.mxu0
        %v2096 = vpop.f32.mrf.mxu0
        %2097 = vdwg.mxu0
        %v2098 = vmul.f32 %v2093, 0.5
        %v2099 = vmul.f32 %v2093, 0.044715
        %v2100 = vmul.f32 %v2099, %v2093
        %v2101 = vmul.f32 %v2100, %v2093
        %v2102 = vadd.f32 %v2093, %v2101
        %v2103 = vmul.f32 %v2102, 0.7978846
        %v2104 = vtanh.pop %v2103
        %v2105 = vadd.f32 %v2104, 1.0
        %v2106 = vmul.f32 %v2098, %v2105
        %v2107 = vpack.c.bf16 %v2106, %v2106
        %s2108 = scalar_lea.vmem %s12, 32
        %v2109 = vld [vmem:[%s2108] sm:$0xf]
        %v2110 = vld [vmem:[%s2108 + $0x4] sm:$0xf]
        %v2111 = vld [vmem:[%s2108 + $0x8] sm:$0xf]
        %v2112 = vld [vmem:[%s2108 + $0xc] sm:$0xf]
        %v2113 = vld [vmem:[%s2108 + $0x10] sm:$0xf]
        %v2114 = vld [vmem:[%s2108 + $0x14] sm:$0xf]
        %v2115 = vld [vmem:[%s2108 + $0x18] sm:$0xf]
        %v2116 = vld [vmem:[%s2108 + $0x1c] sm:$0xf]
        %s2117 = scalar_lea.vmem %s13, 1
        %v2118 = vld [vmem:[%s2117] sm:$0x1]
        %v2120 = vlaneseq
        %v2121 = vshrl.u32 %v2120, 7
        %v2122 = vsub.s32 0, %v2121
        %v2123 = vrot.slane %v2118, %v2122
        %v2133 = vunpack.c.l.b16 %v2109
        %v2134 = vunpack.c.l.b16 %v2110
        %v2135 = vunpack.c.l.b16 %v2111
        %v2136 = vunpack.c.l.b16 %v2112
        %v2137 = vunpack.c.l.b16 %v2113
        %v2138 = vunpack.c.l.b16 %v2114
        %v2139 = vunpack.c.l.b16 %v2115
        %v2140 = vunpack.c.l.b16 %v2116
        %v2141 = vpack.c.b16 %v2134, %v2133
        %v2142 = vpack.c.b16 %v2136, %v2135
        %v2143 = vpack.c.b16 %v2138, %v2137
        %v2144 = vpack.c.b16 %v2140, %v2139
        %v2150 = vsel %vm1320, %v2107, 0
        %2152 = vmatprep.subr.bf16.mxu0 0
        %2153 = vmatpush1.bf16.msra.mxu0 0
        %2154 = vmatprep.subr.bf16.mxu0 0
        %2155 = vmatpush1.bf16.msra.mxu0 0
        %2156 = vmatprep.subr.bf16.mxu0 0
        %2157 = vmatpush1.bf16.msra.mxu0 0
        %2158 = vmatprep.subr.bf16.mxu0 0
        %2159 = vmatpush1.bf16.msra.mxu0 0
        %2160 = vmatprep.subr.bf16.mxu0 0
        %2161 = vmatpush1.bf16.msra.mxu0 %v2144
        %2162 = vmatprep.subr.bf16.mxu0 0
        %2163 = vmatpush1.bf16.msra.mxu0 %v2143
        %2164 = vmatprep.subr.bf16.mxu0 0
        %2165 = vmatpush1.bf16.msra.mxu0 %v2142
        %2166 = vmatprep.subr.bf16.mxu0 0
        %2167 = vmatpush1.bf16.msra.mxu0 %v2141
        %2168 = vmatprep.subr.bf16.mxu0 0
        %2169 = vmatpush2.bf16.msra.mxu0 0
        %2170 = vmatprep.subr.bf16.mxu0 0
        %2171 = vmatpush2.bf16.msra.mxu0 0
        %2172 = vmatprep.subr.bf16.mxu0 0
        %2173 = vmatpush2.bf16.msra.mxu0 0
        %2174 = vmatprep.subr.bf16.mxu0 0
        %2175 = vmatpush2.bf16.msra.mxu0 0
        %2176 = vmatprep.subr.bf16.mxu0 0
        %2177 = vmatpush2.bf16.msra.mxu0 0
        %2178 = vmatprep.subr.bf16.mxu0 0
        %2179 = vmatpush2.bf16.msra.mxu0 0
        %2180 = vmatprep.subr.bf16.mxu0 0
        %2181 = vmatpush2.bf16.msra.mxu0 0
        %2182 = vmatprep.subr.bf16.mxu0 0
        %2183 = vmatpush2.bf16.msra.mxu0 0
        %2184 = vmatprep.mubr.bf16.mxu0 0
        %2185 = vmatmul.mubr.bf16.gmra.mxu0 %v2150
        %v2186 = vpop.f32.mrf.mxu0
        %v2187 = vadd.f32 %v2123, %v2186
        %v2188 = vpop.f32.mrf.mxu0
        %v2189 = vpop.f32.mrf.mxu0
        %v2190 = vpop.f32.mrf.mxu0
        %2191 = vdwg.mxu0
        %v2192 = vadd.f32 %v2187, %v2028
        %s2193 = scalar_lea.vmem %s14, 1
        %v2194 = vld [vmem:[%s2193] sm:$0x1]
        %s2195 = scalar_lea.vmem %s15, 1
        %v2196 = vld [vmem:[%s2195] sm:$0x1]
        %v2197 = vsel %vm535, %v2192, 0.0
        %2198 = vadd.xlane.f32.xlu0 %v2197
        %v2199 = vpop.xlane.xlu0 %2198
        %v2200 = vmul.f32 %v2199, %v539
        %v2201 = vsub.f32 %v2192, %v2200
        %v2202 = vmul.f32 %v2201, %v2201
        %v2203 = vsel %vm535, %v2202, 0.0
        %2204 = vadd.xlane.f32.xlu0 %v2203
        %v2205 = vpop.xlane.xlu0 %2204
        %v2206 = vmul.f32 %v2205, %v539
        %v2207 = vadd.f32 %v2206, 1e-12
        %v2208 = vrsqrt.pop %v2207
        %v2209 = vmul.f32 %v2201, %v2208
        %v2211 = vlaneseq
        %v2212 = vshrl.u32 %v2211, 7
        %v2213 = vsub.s32 0, %v2212
        %v2214 = vrot.slane %v2194, %v2213
        %v2216 = vmul.f32 %v2209, %v2214
        %v2218 = vlaneseq
        %v2219 = vshrl.u32 %v2218, 7
        %v2220 = vsub.s32 0, %v2219
        %v2221 = vrot.slane %v2196, %v2220
        %v2223 = vadd.f32 %v2216, %v2221
        %2224 = vst.msk [vmem:[%s523] sm:$0xff] %vm535, %v2223
        %s2225 = sand.u32 %s384, 1
        %s2226 = scalar_lea.sflag [#allocation3], %s2225
        %s2227 = sand.u32 %s384, 1
        %s2228 = smul.addr %s2227, 8
        %s2229 = scalar_lea.vmem [#allocation2], %s2228
        // Predicated region
        $region85: #{bert_forward.1} parent=83 // pred_check
          %p2230 = pneg %p394
        $region86: #{bert_forward.1} parent=83 // pred_check_branch
          %2232 = sbr.rel (%p2230) target = $region88
        $region87: #{bert_forward.1} parent=83 // pred_region
          %s2234 = ssub.s32 128, 128
          %2235 = vsyncadd %s2226, %s2234
          %s2236 = smul.addr %s30, 128
          %s2237 = scalar_lea.hbm %s16, %s2236
          %s2239 = sshll.u32 %s2229, 4
          %s2240 = int_to_ptr.vmem [resolvable:$true] %s2239
          %2242 = dma.vmem_to_hbm [thread:$0]  %s2240, 128, %s2237, %s2226
        $region88: #{bert_forward.1} parent=83 // pred_fallthru
          _
      $region84: #{bert_forward.1} parent=5 // pred_fallthru
        _
      %p2243 = scmp.le.s32.totalorder 2, %s25
      // Predicated region
      $region89: #{bert_forward.1} parent=5 // pred_check
        %p2244 = pneg %p2243
      $region90: #{bert_forward.1} parent=5 // pred_check_branch
        %2246 = sbr.rel (%p2244) target = $region92
      $region91: #{bert_forward.1} parent=5 // pred_region
        %s2247 = ssub.s32 %s25, 2
        // Predicated region
        $region93: #{bert_forward.1} parent=91 // pred_check
          %p2248 = pneg %p400
        $region94: #{bert_forward.1} parent=91 // pred_check_branch
          %2250 = sbr.rel (%p2248) target = $region96
        $region95: #{bert_forward.1} parent=91 // pred_region
          %s2251 = sand.u32 %s385, 1
          %s2252 = scalar_lea.sflag [#allocation3], %s2251
          %s2253 = sand.u32 %s385, 1
          %s2254 = smul.addr %s2253, 8
          %s2255 = scalar_lea.vmem [#allocation2], %s2254
          %2256 = dma.done %s2252, 128
        $region96: #{bert_forward.1} parent=91 // pred_fallthru
          _
      $region92: #{bert_forward.1} parent=5 // pred_fallthru
        _
    $region6: #{bert_forward.1} parent=1 // loop_footer
      %s29 = sadd.s32 1, %s25
    $region7: #{bert_forward.1} parent=1 // loop_footer_branch
      %24 = sbr.rel target = $region3
    $region8: #{bert_forward.1} parent=1 // loop_exit
      _
    %2257 = vsyncpa [#allocation3], 1
    %s2258 = scalar_lea.sflag [#allocation3], 1
    %2259 = vsyncpa %s2258, 1

</llo_original>
